<compile_context>
chip_gen: v7x
topology: tpu7x:2x2x1
jax: 0.10.0
libtpu: 0.0.40
codegen_flags: <defaults>
</compile_context>

<pallas_src>
import functools

import jax
import jax.numpy as jnp
from jax.experimental import pallas as pl
from jax.experimental.pallas import tpu as pltpu

EMBED_DIMENSION = 32     # small synthetic size (reference code uses 300)
EMBED_MAX_NORM = 1.0     # max_norm on the embedding (p=2 renorm at lookup time)
RENORM_EPS = 1e-7        # PyTorch embedding_renorm_ uses max_norm / (norm + 1e-7)

LANE = 128               # TPU lane width
TILE_V = 256             # vocab tile width for the linear weight / output


def _round_up(x, m):
    return (x + m - 1) // m * m


def _cbow_kernel(idx_ref, emb_ref, w_ref, b_ref, out_ref, xmean_ref, *, B, C):
    """One grid step produces one lane-dense (B, TILE_V) slice of the logits.

    idx_ref  : (B*C,) int32 token ids, SMEM (scalar prefetch)
    emb_ref  : (Vp, Dp) f32 embedding table, VMEM (constant index map -> resident)
    w_ref    : (Dp, TILE_V) bf16 linear weight tile (pre-transposed)
    b_ref    : (1, TILE_V) f32 bias tile
    out_ref  : (B, TILE_V) f32 logits tile
    xmean_ref: (B, Dp) f32 VMEM scratch holding the context-mean embedding
    """
    j = pl.program_id(0)

    # ---- once per kernel: fused gather + max_norm renorm + context mean ----
    @pl.when(j == 0)
    def _():
        Vp, Dp = emb_ref.shape
        emb = emb_ref[...]                                       # (Vp, Dp) f32

        # Per-vocab-row renorm scale (nn.Embedding(max_norm=...) semantics).
        # rsqrt goes to the EUP slot; PyTorch's +eps in the denominator only
        # changes the scale by <= 1e-7 relative, so it is dropped here.
        sumsq = jnp.sum(emb * emb, axis=-1, keepdims=True)       # (Vp, 1)
        scale = jnp.where(sumsq > EMBED_MAX_NORM * EMBED_MAX_NORM,
                          EMBED_MAX_NORM * jax.lax.rsqrt(sumsq),
                          jnp.float32(1.0))
        emb_n = (emb * scale).astype(jnp.bfloat16)               # (Vp, Dp)

        # Bag-of-words matrix from the SMEM token ids:
        #   bow[b, v] = (# of occurrences of v in context b) / C
        row = jax.lax.broadcasted_iota(jnp.int32, (B, Vp), 0)
        col = jax.lax.broadcasted_iota(jnp.int32, (B, Vp), 1)
        inv_c = jnp.float32(1.0 / C)
        bow = jnp.zeros((B, Vp), jnp.float32)
        for t in range(B * C):                    # B*C is tiny -> unrolled
            tok = idx_ref[t]
            bow = bow + jnp.where((row == t // C) & (col == tok),
                                  inv_c, jnp.float32(0.0))

        # x_mean = bow @ (scale * emb): gather, renorm and mean in one MXU op.
        xmean_ref[...] = jnp.dot(bow.astype(jnp.bfloat16), emb_n,
                                 preferred_element_type=jnp.float32)

    # ---- every grid step: one lane-dense vocab tile of the linear layer ----
    out_ref[...] = (
        jnp.dot(xmean_ref[...].astype(jnp.bfloat16), w_ref[...],
                preferred_element_type=jnp.float32)
        + b_ref[...])


def cbow_forward(inputs_, emb_weight, lin_weight, lin_bias, *, tile_v=TILE_V):
    """inputs_: (B, C) int ids; emb_weight: (V, D); lin_weight: (V, D); lin_bias: (V,)."""
    B, C = inputs_.shape
    V, D = emb_weight.shape

    Dp = _round_up(D, LANE)
    Vp = _round_up(V, tile_v)                 # tile_v is a multiple of 128

    # Zero-pad weights to lane-dense shapes (padded rows/cols contribute 0).
    emb_p = jnp.zeros((Vp, Dp), jnp.float32).at[:V, :D].set(
        emb_weight.astype(jnp.float32))
    w_t = jnp.zeros((Dp, Vp), jnp.bfloat16).at[:D, :V].set(
        lin_weight.astype(jnp.bfloat16).T)          # pre-transposed (D, V)
    b_p = jnp.zeros((1, Vp), jnp.float32).at[0, :V].set(
        lin_bias.astype(jnp.float32))
    idx_flat = inputs_.reshape(B * C).astype(jnp.int32)

    grid = (Vp // tile_v,)

    grid_spec = pltpu.PrefetchScalarGridSpec(
        num_scalar_prefetch=1,                # token ids land in SMEM
        grid=grid,
        in_specs=[
            # Full embedding table; constant block index -> stays resident.
            # TODO(synk): at production vocab (V ~ 5e4) replace this with a
            # scalar-prefetch-driven row gather (or manual make_async_copy of
            # the B*C rows) instead of loading the whole table into VMEM.
            pl.BlockSpec((Vp, Dp), lambda j, idx: (0, 0)),
            pl.BlockSpec((Dp, tile_v), lambda j, idx: (0, j)),   # weight tile
            pl.BlockSpec((1, tile_v), lambda j, idx: (0, j)),    # bias tile
        ],
        out_specs=pl.BlockSpec((B, tile_v), lambda j, idx: (0, j)),
        scratch_shapes=[pltpu.VMEM((B, Dp), jnp.float32)],       # x_mean
    )

    out_p = pl.pallas_call(
        functools.partial(_cbow_kernel, B=B, C=C),
        out_shape=jax.ShapeDtypeStruct((B, Vp), jnp.float32),
        grid_spec=grid_spec,
        compiler_params=pltpu.CompilerParams(
            # "arbitrary": the x_mean scratch written at j == 0 is reused by
            # every later vocab tile.  (On v7x, recomputing x_mean per tile
            # would allow "parallel" across the two TensorCores.)
            dimension_semantics=("arbitrary",),
            vmem_limit_bytes=32 * 1024 * 1024,   # explicit; tiles sized well under 64 MiB (v7x)
        ),
    )(idx_flat, emb_p, w_t, b_p)

    return out_p[:, :V]


def reference_forward(inputs_, emb_weight, lin_weight, lin_bias):
    """Pure-JAX reference replicating the PyTorch forward semantics (f32)."""
    x = emb_weight[inputs_]                                        # (B, C, D)
    norm = jnp.sqrt(jnp.sum(x * x, axis=-1, keepdims=True))
    scale = jnp.where(norm > EMBED_MAX_NORM,
                      EMBED_MAX_NORM / (norm + RENORM_EPS), 1.0)
    x = x * scale
    x = x.mean(axis=1)                                             # (B, D)
    return x @ lin_weight.T + lin_bias                             # (B, V)


if __name__ == "__main__":
    VOCAB_SIZE = 500            # pads to 512 -> grid of 2 vocab tiles
    B, C, D = 8, 4, EMBED_DIMENSION

    key = jax.random.PRNGKey(0)
    k_idx, k_emb, k_w, k_b = jax.random.split(key, 4)

    inputs_ = jax.random.randint(k_idx, (B, C), 0, VOCAB_SIZE, dtype=jnp.int32)
    # nn.Embedding default init: N(0, 1)
    emb_weight = jax.random.normal(k_emb, (VOCAB_SIZE, D), dtype=jnp.float32)
    # nn.Linear default init: U(-1/sqrt(in_features), 1/sqrt(in_features))
    bound = 1.0 / jnp.sqrt(jnp.float32(D))
    lin_weight = jax.random.uniform(k_w, (VOCAB_SIZE, D), jnp.float32, -bound, bound)
    lin_bias = jax.random.uniform(k_b, (VOCAB_SIZE,), jnp.float32, -bound, bound)

    out = cbow_forward(inputs_, emb_weight, lin_weight, lin_bias)
    out = jax.block_until_ready(out)

    ref = reference_forward(inputs_, emb_weight, lin_weight, lin_bias)
    assert out.shape == (B, VOCAB_SIZE)
    # bf16 MXU operands -> tolerance looser than the previous all-f32 version.
    assert jnp.allclose(out, ref, atol=2e-2, rtol=2e-2), (
        "mismatch vs reference: max abs err = "
        f"{jnp.max(jnp.abs(out - ref)):.3e}")

    print("KERNEL_OK")
</pallas_src>

<mosaic_0001>
module attributes {stable_mosaic.version = 11 : i64} {
  func.func @_cbow_kernel(%arg0: i32, %arg1: memref<32xi32, #tpu.memory_space<smem>>, %arg2: memref<512x128xf32, #tpu.memory_space<vmem>>, %arg3: memref<128x256xbf16, #tpu.memory_space<vmem>>, %arg4: memref<1x256xf32, #tpu.memory_space<vmem>>, %arg5: memref<8x256xf32, #tpu.memory_space<vmem>>, %arg6: memref<8x128xf32, #tpu.memory_space<vmem>>) attributes {dimension_semantics = [#tpu.dimension_semantics<arbitrary>], iteration_bounds = array<i64: 2>, scalar_prefetch = 1 : i64, scratch_operands = 1 : i64, tpu.core_type = #tpu.core_type<tc>, window_params = [{pipeline_mode = #tpu.pipeline_mode<synchronous>, transform_indices = @transform_0, window_bounds = array<i64: 512, 128>}, {transform_indices = @transform_1, window_bounds = array<i64: 128, 256>}, {transform_indices = @transform_2, window_bounds = array<i64: 1, 256>}, {transform_indices = @transform_3, window_bounds = array<i64: 8, 256>}]} {
    %c0_i32 = arith.constant 0 : i32
    %0 = arith.cmpi eq, %arg0, %c0_i32 : i32
    %1 = arith.extui %0 : i1 to i32
    %c0_i32_0 = arith.constant 0 : i32
    %2 = arith.cmpi ne, %1, %c0_i32_0 : i32
    scf.if %2 {
      %c0_8 = arith.constant 0 : index
      %c0_9 = arith.constant 0 : index
      %11 = vector.load %arg2[%c0_8, %c0_9] : memref<512x128xf32, #tpu.memory_space<vmem>>, vector<512x128xf32>
      %12 = arith.mulf %11, %11 : vector<512x128xf32>
      %cst_10 = arith.constant dense<0.000000e+00> : vector<512xf32>
      %13 = vector.multi_reduction <add>, %12, %cst_10 [1] : vector<512x128xf32> to vector<512xf32>
      %14 = vector.shape_cast %13 : vector<512xf32> to vector<512x1xf32>
      %cst_11 = arith.constant 1.000000e+00 : f32
      %15 = vector.broadcast %cst_11 : f32 to vector<512x1xf32>
      %16 = arith.cmpf ogt, %14, %15 : vector<512x1xf32>
      %17 = math.rsqrt %14 : vector<512x1xf32>
      %cst_12 = arith.constant 1.000000e+00 : f32
      %18 = vector.broadcast %cst_12 : f32 to vector<512x1xf32>
      %19 = arith.mulf %18, %17 : vector<512x1xf32>
      %cst_13 = arith.constant 1.000000e+00 : f32
      %20 = vector.broadcast %cst_13 : f32 to vector<512x1xf32>
      %21 = arith.select %16, %19, %20 : vector<512x1xi1>, vector<512x1xf32>
      %22 = vector.broadcast %21 : vector<512x1xf32> to vector<512x128xf32>
      %23 = arith.mulf %11, %22 : vector<512x128xf32>
      %24 = arith.truncf %23 : vector<512x128xf32> to vector<512x128xbf16>
      %25 = tpu.iota {dimensions = array<i32: 0>} : vector<8x512xi32>
      %26 = tpu.iota {dimensions = array<i32: 1>} : vector<8x512xi32>
      %cst_14 = arith.constant 0.000000e+00 : f32
      %27 = vector.broadcast %cst_14 : f32 to vector<8x512xf32>
      %c0_15 = arith.constant 0 : index
      %28 = memref.load %arg1[%c0_15] : memref<32xi32, #tpu.memory_space<smem>>
      %c0_i32_16 = arith.constant 0 : i32
      %29 = vector.broadcast %c0_i32_16 : i32 to vector<8x512xi32>
      %30 = arith.cmpi eq, %25, %29 : vector<8x512xi32>
      %31 = vector.broadcast %28 : i32 to vector<8x512xi32>
      %32 = arith.cmpi eq, %26, %31 : vector<8x512xi32>
      %33 = arith.andi %30, %32 : vector<8x512xi1>
      %cst_17 = arith.constant 2.500000e-01 : f32
      %cst_18 = arith.constant 0.000000e+00 : f32
      %34 = vector.broadcast %cst_17 : f32 to vector<8x512xf32>
      %35 = vector.broadcast %cst_18 : f32 to vector<8x512xf32>
      %36 = arith.select %33, %34, %35 : vector<8x512xi1>, vector<8x512xf32>
      %37 = arith.addf %27, %36 : vector<8x512xf32>
      %c1 = arith.constant 1 : index
      %38 = memref.load %arg1[%c1] : memref<32xi32, #tpu.memory_space<smem>>
      %c0_i32_19 = arith.constant 0 : i32
      %39 = vector.broadcast %c0_i32_19 : i32 to vector<8x512xi32>
      %40 = arith.cmpi eq, %25, %39 : vector<8x512xi32>
      %41 = vector.broadcast %38 : i32 to vector<8x512xi32>
      %42 = arith.cmpi eq, %26, %41 : vector<8x512xi32>
      %43 = arith.andi %40, %42 : vector<8x512xi1>
      %cst_20 = arith.constant 2.500000e-01 : f32
      %cst_21 = arith.constant 0.000000e+00 : f32
      %44 = vector.broadcast %cst_20 : f32 to vector<8x512xf32>
      %45 = vector.broadcast %cst_21 : f32 to vector<8x512xf32>
      %46 = arith.select %43, %44, %45 : vector<8x512xi1>, vector<8x512xf32>
      %47 = arith.addf %37, %46 : vector<8x512xf32>
      %c2 = arith.constant 2 : index
      %48 = memref.load %arg1[%c2] : memref<32xi32, #tpu.memory_space<smem>>
      %c0_i32_22 = arith.constant 0 : i32
      %49 = vector.broadcast %c0_i32_22 : i32 to vector<8x512xi32>
      %50 = arith.cmpi eq, %25, %49 : vector<8x512xi32>
      %51 = vector.broadcast %48 : i32 to vector<8x512xi32>
      %52 = arith.cmpi eq, %26, %51 : vector<8x512xi32>
      %53 = arith.andi %50, %52 : vector<8x512xi1>
      %cst_23 = arith.constant 2.500000e-01 : f32
      %cst_24 = arith.constant 0.000000e+00 : f32
      %54 = vector.broadcast %cst_23 : f32 to vector<8x512xf32>
      %55 = vector.broadcast %cst_24 : f32 to vector<8x512xf32>
      %56 = arith.select %53, %54, %55 : vector<8x512xi1>, vector<8x512xf32>
      %57 = arith.addf %47, %56 : vector<8x512xf32>
      %c3 = arith.constant 3 : index
      %58 = memref.load %arg1[%c3] : memref<32xi32, #tpu.memory_space<smem>>
      %c0_i32_25 = arith.constant 0 : i32
      %59 = vector.broadcast %c0_i32_25 : i32 to vector<8x512xi32>
      %60 = arith.cmpi eq, %25, %59 : vector<8x512xi32>
      %61 = vector.broadcast %58 : i32 to vector<8x512xi32>
      %62 = arith.cmpi eq, %26, %61 : vector<8x512xi32>
      %63 = arith.andi %60, %62 : vector<8x512xi1>
      %cst_26 = arith.constant 2.500000e-01 : f32
      %cst_27 = arith.constant 0.000000e+00 : f32
      %64 = vector.broadcast %cst_26 : f32 to vector<8x512xf32>
      %65 = vector.broadcast %cst_27 : f32 to vector<8x512xf32>
      %66 = arith.select %63, %64, %65 : vector<8x512xi1>, vector<8x512xf32>
      %67 = arith.addf %57, %66 : vector<8x512xf32>
      %c4 = arith.constant 4 : index
      %68 = memref.load %arg1[%c4] : memref<32xi32, #tpu.memory_space<smem>>
      %c1_i32 = arith.constant 1 : i32
      %69 = vector.broadcast %c1_i32 : i32 to vector<8x512xi32>
      %70 = arith.cmpi eq, %25, %69 : vector<8x512xi32>
      %71 = vector.broadcast %68 : i32 to vector<8x512xi32>
      %72 = arith.cmpi eq, %26, %71 : vector<8x512xi32>
      %73 = arith.andi %70, %72 : vector<8x512xi1>
      %cst_28 = arith.constant 2.500000e-01 : f32
      %cst_29 = arith.constant 0.000000e+00 : f32
      %74 = vector.broadcast %cst_28 : f32 to vector<8x512xf32>
      %75 = vector.broadcast %cst_29 : f32 to vector<8x512xf32>
      %76 = arith.select %73, %74, %75 : vector<8x512xi1>, vector<8x512xf32>
      %77 = arith.addf %67, %76 : vector<8x512xf32>
      %c5 = arith.constant 5 : index
      %78 = memref.load %arg1[%c5] : memref<32xi32, #tpu.memory_space<smem>>
      %c1_i32_30 = arith.constant 1 : i32
      %79 = vector.broadcast %c1_i32_30 : i32 to vector<8x512xi32>
      %80 = arith.cmpi eq, %25, %79 : vector<8x512xi32>
      %81 = vector.broadcast %78 : i32 to vector<8x512xi32>
      %82 = arith.cmpi eq, %26, %81 : vector<8x512xi32>
      %83 = arith.andi %80, %82 : vector<8x512xi1>
      %cst_31 = arith.constant 2.500000e-01 : f32
      %cst_32 = arith.constant 0.000000e+00 : f32
      %84 = vector.broadcast %cst_31 : f32 to vector<8x512xf32>
      %85 = vector.broadcast %cst_32 : f32 to vector<8x512xf32>
      %86 = arith.select %83, %84, %85 : vector<8x512xi1>, vector<8x512xf32>
      %87 = arith.addf %77, %86 : vector<8x512xf32>
      %c6 = arith.constant 6 : index
      %88 = memref.load %arg1[%c6] : memref<32xi32, #tpu.memory_space<smem>>
      %c1_i32_33 = arith.constant 1 : i32
      %89 = vector.broadcast %c1_i32_33 : i32 to vector<8x512xi32>
      %90 = arith.cmpi eq, %25, %89 : vector<8x512xi32>
      %91 = vector.broadcast %88 : i32 to vector<8x512xi32>
      %92 = arith.cmpi eq, %26, %91 : vector<8x512xi32>
      %93 = arith.andi %90, %92 : vector<8x512xi1>
      %cst_34 = arith.constant 2.500000e-01 : f32
      %cst_35 = arith.constant 0.000000e+00 : f32
      %94 = vector.broadcast %cst_34 : f32 to vector<8x512xf32>
      %95 = vector.broadcast %cst_35 : f32 to vector<8x512xf32>
      %96 = arith.select %93, %94, %95 : vector<8x512xi1>, vector<8x512xf32>
      %97 = arith.addf %87, %96 : vector<8x512xf32>
      %c7 = arith.constant 7 : index
      %98 = memref.load %arg1[%c7] : memref<32xi32, #tpu.memory_space<smem>>
      %c1_i32_36 = arith.constant 1 : i32
      %99 = vector.broadcast %c1_i32_36 : i32 to vector<8x512xi32>
      %100 = arith.cmpi eq, %25, %99 : vector<8x512xi32>
      %101 = vector.broadcast %98 : i32 to vector<8x512xi32>
      %102 = arith.cmpi eq, %26, %101 : vector<8x512xi32>
      %103 = arith.andi %100, %102 : vector<8x512xi1>
      %cst_37 = arith.constant 2.500000e-01 : f32
      %cst_38 = arith.constant 0.000000e+00 : f32
      %104 = vector.broadcast %cst_37 : f32 to vector<8x512xf32>
      %105 = vector.broadcast %cst_38 : f32 to vector<8x512xf32>
      %106 = arith.select %103, %104, %105 : vector<8x512xi1>, vector<8x512xf32>
      %107 = arith.addf %97, %106 : vector<8x512xf32>
      %c8 = arith.constant 8 : index
      %108 = memref.load %arg1[%c8] : memref<32xi32, #tpu.memory_space<smem>>
      %c2_i32 = arith.constant 2 : i32
      %109 = vector.broadcast %c2_i32 : i32 to vector<8x512xi32>
      %110 = arith.cmpi eq, %25, %109 : vector<8x512xi32>
      %111 = vector.broadcast %108 : i32 to vector<8x512xi32>
      %112 = arith.cmpi eq, %26, %111 : vector<8x512xi32>
      %113 = arith.andi %110, %112 : vector<8x512xi1>
      %cst_39 = arith.constant 2.500000e-01 : f32
      %cst_40 = arith.constant 0.000000e+00 : f32
      %114 = vector.broadcast %cst_39 : f32 to vector<8x512xf32>
      %115 = vector.broadcast %cst_40 : f32 to vector<8x512xf32>
      %116 = arith.select %113, %114, %115 : vector<8x512xi1>, vector<8x512xf32>
      %117 = arith.addf %107, %116 : vector<8x512xf32>
      %c9 = arith.constant 9 : index
      %118 = memref.load %arg1[%c9] : memref<32xi32, #tpu.memory_space<smem>>
      %c2_i32_41 = arith.constant 2 : i32
      %119 = vector.broadcast %c2_i32_41 : i32 to vector<8x512xi32>
      %120 = arith.cmpi eq, %25, %119 : vector<8x512xi32>
      %121 = vector.broadcast %118 : i32 to vector<8x512xi32>
      %122 = arith.cmpi eq, %26, %121 : vector<8x512xi32>
      %123 = arith.andi %120, %122 : vector<8x512xi1>
      %cst_42 = arith.constant 2.500000e-01 : f32
      %cst_43 = arith.constant 0.000000e+00 : f32
      %124 = vector.broadcast %cst_42 : f32 to vector<8x512xf32>
      %125 = vector.broadcast %cst_43 : f32 to vector<8x512xf32>
      %126 = arith.select %123, %124, %125 : vector<8x512xi1>, vector<8x512xf32>
      %127 = arith.addf %117, %126 : vector<8x512xf32>
      %c10 = arith.constant 10 : index
      %128 = memref.load %arg1[%c10] : memref<32xi32, #tpu.memory_space<smem>>
      %c2_i32_44 = arith.constant 2 : i32
      %129 = vector.broadcast %c2_i32_44 : i32 to vector<8x512xi32>
      %130 = arith.cmpi eq, %25, %129 : vector<8x512xi32>
      %131 = vector.broadcast %128 : i32 to vector<8x512xi32>
      %132 = arith.cmpi eq, %26, %131 : vector<8x512xi32>
      %133 = arith.andi %130, %132 : vector<8x512xi1>
      %cst_45 = arith.constant 2.500000e-01 : f32
      %cst_46 = arith.constant 0.000000e+00 : f32
      %134 = vector.broadcast %cst_45 : f32 to vector<8x512xf32>
      %135 = vector.broadcast %cst_46 : f32 to vector<8x512xf32>
      %136 = arith.select %133, %134, %135 : vector<8x512xi1>, vector<8x512xf32>
      %137 = arith.addf %127, %136 : vector<8x512xf32>
      %c11 = arith.constant 11 : index
      %138 = memref.load %arg1[%c11] : memref<32xi32, #tpu.memory_space<smem>>
      %c2_i32_47 = arith.constant 2 : i32
      %139 = vector.broadcast %c2_i32_47 : i32 to vector<8x512xi32>
      %140 = arith.cmpi eq, %25, %139 : vector<8x512xi32>
      %141 = vector.broadcast %138 : i32 to vector<8x512xi32>
      %142 = arith.cmpi eq, %26, %141 : vector<8x512xi32>
      %143 = arith.andi %140, %142 : vector<8x512xi1>
      %cst_48 = arith.constant 2.500000e-01 : f32
      %cst_49 = arith.constant 0.000000e+00 : f32
      %144 = vector.broadcast %cst_48 : f32 to vector<8x512xf32>
      %145 = vector.broadcast %cst_49 : f32 to vector<8x512xf32>
      %146 = arith.select %143, %144, %145 : vector<8x512xi1>, vector<8x512xf32>
      %147 = arith.addf %137, %146 : vector<8x512xf32>
      %c12 = arith.constant 12 : index
      %148 = memref.load %arg1[%c12] : memref<32xi32, #tpu.memory_space<smem>>
      %c3_i32 = arith.constant 3 : i32
      %149 = vector.broadcast %c3_i32 : i32 to vector<8x512xi32>
      %150 = arith.cmpi eq, %25, %149 : vector<8x512xi32>
      %151 = vector.broadcast %148 : i32 to vector<8x512xi32>
      %152 = arith.cmpi eq, %26, %151 : vector<8x512xi32>
      %153 = arith.andi %150, %152 : vector<8x512xi1>
      %cst_50 = arith.constant 2.500000e-01 : f32
      %cst_51 = arith.constant 0.000000e+00 : f32
      %154 = vector.broadcast %cst_50 : f32 to vector<8x512xf32>
      %155 = vector.broadcast %cst_51 : f32 to vector<8x512xf32>
      %156 = arith.select %153, %154, %155 : vector<8x512xi1>, vector<8x512xf32>
      %157 = arith.addf %147, %156 : vector<8x512xf32>
      %c13 = arith.constant 13 : index
      %158 = memref.load %arg1[%c13] : memref<32xi32, #tpu.memory_space<smem>>
      %c3_i32_52 = arith.constant 3 : i32
      %159 = vector.broadcast %c3_i32_52 : i32 to vector<8x512xi32>
      %160 = arith.cmpi eq, %25, %159 : vector<8x512xi32>
      %161 = vector.broadcast %158 : i32 to vector<8x512xi32>
      %162 = arith.cmpi eq, %26, %161 : vector<8x512xi32>
      %163 = arith.andi %160, %162 : vector<8x512xi1>
      %cst_53 = arith.constant 2.500000e-01 : f32
      %cst_54 = arith.constant 0.000000e+00 : f32
      %164 = vector.broadcast %cst_53 : f32 to vector<8x512xf32>
      %165 = vector.broadcast %cst_54 : f32 to vector<8x512xf32>
      %166 = arith.select %163, %164, %165 : vector<8x512xi1>, vector<8x512xf32>
      %167 = arith.addf %157, %166 : vector<8x512xf32>
      %c14 = arith.constant 14 : index
      %168 = memref.load %arg1[%c14] : memref<32xi32, #tpu.memory_space<smem>>
      %c3_i32_55 = arith.constant 3 : i32
      %169 = vector.broadcast %c3_i32_55 : i32 to vector<8x512xi32>
      %170 = arith.cmpi eq, %25, %169 : vector<8x512xi32>
      %171 = vector.broadcast %168 : i32 to vector<8x512xi32>
      %172 = arith.cmpi eq, %26, %171 : vector<8x512xi32>
      %173 = arith.andi %170, %172 : vector<8x512xi1>
      %cst_56 = arith.constant 2.500000e-01 : f32
      %cst_57 = arith.constant 0.000000e+00 : f32
      %174 = vector.broadcast %cst_56 : f32 to vector<8x512xf32>
      %175 = vector.broadcast %cst_57 : f32 to vector<8x512xf32>
      %176 = arith.select %173, %174, %175 : vector<8x512xi1>, vector<8x512xf32>
      %177 = arith.addf %167, %176 : vector<8x512xf32>
      %c15 = arith.constant 15 : index
      %178 = memref.load %arg1[%c15] : memref<32xi32, #tpu.memory_space<smem>>
      %c3_i32_58 = arith.constant 3 : i32
      %179 = vector.broadcast %c3_i32_58 : i32 to vector<8x512xi32>
      %180 = arith.cmpi eq, %25, %179 : vector<8x512xi32>
      %181 = vector.broadcast %178 : i32 to vector<8x512xi32>
      %182 = arith.cmpi eq, %26, %181 : vector<8x512xi32>
      %183 = arith.andi %180, %182 : vector<8x512xi1>
      %cst_59 = arith.constant 2.500000e-01 : f32
      %cst_60 = arith.constant 0.000000e+00 : f32
      %184 = vector.broadcast %cst_59 : f32 to vector<8x512xf32>
      %185 = vector.broadcast %cst_60 : f32 to vector<8x512xf32>
      %186 = arith.select %183, %184, %185 : vector<8x512xi1>, vector<8x512xf32>
      %187 = arith.addf %177, %186 : vector<8x512xf32>
      %c16 = arith.constant 16 : index
      %188 = memref.load %arg1[%c16] : memref<32xi32, #tpu.memory_space<smem>>
      %c4_i32 = arith.constant 4 : i32
      %189 = vector.broadcast %c4_i32 : i32 to vector<8x512xi32>
      %190 = arith.cmpi eq, %25, %189 : vector<8x512xi32>
      %191 = vector.broadcast %188 : i32 to vector<8x512xi32>
      %192 = arith.cmpi eq, %26, %191 : vector<8x512xi32>
      %193 = arith.andi %190, %192 : vector<8x512xi1>
      %cst_61 = arith.constant 2.500000e-01 : f32
      %cst_62 = arith.constant 0.000000e+00 : f32
      %194 = vector.broadcast %cst_61 : f32 to vector<8x512xf32>
      %195 = vector.broadcast %cst_62 : f32 to vector<8x512xf32>
      %196 = arith.select %193, %194, %195 : vector<8x512xi1>, vector<8x512xf32>
      %197 = arith.addf %187, %196 : vector<8x512xf32>
      %c17 = arith.constant 17 : index
      %198 = memref.load %arg1[%c17] : memref<32xi32, #tpu.memory_space<smem>>
      %c4_i32_63 = arith.constant 4 : i32
      %199 = vector.broadcast %c4_i32_63 : i32 to vector<8x512xi32>
      %200 = arith.cmpi eq, %25, %199 : vector<8x512xi32>
      %201 = vector.broadcast %198 : i32 to vector<8x512xi32>
      %202 = arith.cmpi eq, %26, %201 : vector<8x512xi32>
      %203 = arith.andi %200, %202 : vector<8x512xi1>
      %cst_64 = arith.constant 2.500000e-01 : f32
      %cst_65 = arith.constant 0.000000e+00 : f32
      %204 = vector.broadcast %cst_64 : f32 to vector<8x512xf32>
      %205 = vector.broadcast %cst_65 : f32 to vector<8x512xf32>
      %206 = arith.select %203, %204, %205 : vector<8x512xi1>, vector<8x512xf32>
      %207 = arith.addf %197, %206 : vector<8x512xf32>
      %c18 = arith.constant 18 : index
      %208 = memref.load %arg1[%c18] : memref<32xi32, #tpu.memory_space<smem>>
      %c4_i32_66 = arith.constant 4 : i32
      %209 = vector.broadcast %c4_i32_66 : i32 to vector<8x512xi32>
      %210 = arith.cmpi eq, %25, %209 : vector<8x512xi32>
      %211 = vector.broadcast %208 : i32 to vector<8x512xi32>
      %212 = arith.cmpi eq, %26, %211 : vector<8x512xi32>
      %213 = arith.andi %210, %212 : vector<8x512xi1>
      %cst_67 = arith.constant 2.500000e-01 : f32
      %cst_68 = arith.constant 0.000000e+00 : f32
      %214 = vector.broadcast %cst_67 : f32 to vector<8x512xf32>
      %215 = vector.broadcast %cst_68 : f32 to vector<8x512xf32>
      %216 = arith.select %213, %214, %215 : vector<8x512xi1>, vector<8x512xf32>
      %217 = arith.addf %207, %216 : vector<8x512xf32>
      %c19 = arith.constant 19 : index
      %218 = memref.load %arg1[%c19] : memref<32xi32, #tpu.memory_space<smem>>
      %c4_i32_69 = arith.constant 4 : i32
      %219 = vector.broadcast %c4_i32_69 : i32 to vector<8x512xi32>
      %220 = arith.cmpi eq, %25, %219 : vector<8x512xi32>
      %221 = vector.broadcast %218 : i32 to vector<8x512xi32>
      %222 = arith.cmpi eq, %26, %221 : vector<8x512xi32>
      %223 = arith.andi %220, %222 : vector<8x512xi1>
      %cst_70 = arith.constant 2.500000e-01 : f32
      %cst_71 = arith.constant 0.000000e+00 : f32
      %224 = vector.broadcast %cst_70 : f32 to vector<8x512xf32>
      %225 = vector.broadcast %cst_71 : f32 to vector<8x512xf32>
      %226 = arith.select %223, %224, %225 : vector<8x512xi1>, vector<8x512xf32>
      %227 = arith.addf %217, %226 : vector<8x512xf32>
      %c20 = arith.constant 20 : index
      %228 = memref.load %arg1[%c20] : memref<32xi32, #tpu.memory_space<smem>>
      %c5_i32 = arith.constant 5 : i32
      %229 = vector.broadcast %c5_i32 : i32 to vector<8x512xi32>
      %230 = arith.cmpi eq, %25, %229 : vector<8x512xi32>
      %231 = vector.broadcast %228 : i32 to vector<8x512xi32>
      %232 = arith.cmpi eq, %26, %231 : vector<8x512xi32>
      %233 = arith.andi %230, %232 : vector<8x512xi1>
      %cst_72 = arith.constant 2.500000e-01 : f32
      %cst_73 = arith.constant 0.000000e+00 : f32
      %234 = vector.broadcast %cst_72 : f32 to vector<8x512xf32>
      %235 = vector.broadcast %cst_73 : f32 to vector<8x512xf32>
      %236 = arith.select %233, %234, %235 : vector<8x512xi1>, vector<8x512xf32>
      %237 = arith.addf %227, %236 : vector<8x512xf32>
      %c21 = arith.constant 21 : index
      %238 = memref.load %arg1[%c21] : memref<32xi32, #tpu.memory_space<smem>>
      %c5_i32_74 = arith.constant 5 : i32
      %239 = vector.broadcast %c5_i32_74 : i32 to vector<8x512xi32>
      %240 = arith.cmpi eq, %25, %239 : vector<8x512xi32>
      %241 = vector.broadcast %238 : i32 to vector<8x512xi32>
      %242 = arith.cmpi eq, %26, %241 : vector<8x512xi32>
      %243 = arith.andi %240, %242 : vector<8x512xi1>
      %cst_75 = arith.constant 2.500000e-01 : f32
      %cst_76 = arith.constant 0.000000e+00 : f32
      %244 = vector.broadcast %cst_75 : f32 to vector<8x512xf32>
      %245 = vector.broadcast %cst_76 : f32 to vector<8x512xf32>
      %246 = arith.select %243, %244, %245 : vector<8x512xi1>, vector<8x512xf32>
      %247 = arith.addf %237, %246 : vector<8x512xf32>
      %c22 = arith.constant 22 : index
      %248 = memref.load %arg1[%c22] : memref<32xi32, #tpu.memory_space<smem>>
      %c5_i32_77 = arith.constant 5 : i32
      %249 = vector.broadcast %c5_i32_77 : i32 to vector<8x512xi32>
      %250 = arith.cmpi eq, %25, %249 : vector<8x512xi32>
      %251 = vector.broadcast %248 : i32 to vector<8x512xi32>
      %252 = arith.cmpi eq, %26, %251 : vector<8x512xi32>
      %253 = arith.andi %250, %252 : vector<8x512xi1>
      %cst_78 = arith.constant 2.500000e-01 : f32
      %cst_79 = arith.constant 0.000000e+00 : f32
      %254 = vector.broadcast %cst_78 : f32 to vector<8x512xf32>
      %255 = vector.broadcast %cst_79 : f32 to vector<8x512xf32>
      %256 = arith.select %253, %254, %255 : vector<8x512xi1>, vector<8x512xf32>
      %257 = arith.addf %247, %256 : vector<8x512xf32>
      %c23 = arith.constant 23 : index
      %258 = memref.load %arg1[%c23] : memref<32xi32, #tpu.memory_space<smem>>
      %c5_i32_80 = arith.constant 5 : i32
      %259 = vector.broadcast %c5_i32_80 : i32 to vector<8x512xi32>
      %260 = arith.cmpi eq, %25, %259 : vector<8x512xi32>
      %261 = vector.broadcast %258 : i32 to vector<8x512xi32>
      %262 = arith.cmpi eq, %26, %261 : vector<8x512xi32>
      %263 = arith.andi %260, %262 : vector<8x512xi1>
      %cst_81 = arith.constant 2.500000e-01 : f32
      %cst_82 = arith.constant 0.000000e+00 : f32
      %264 = vector.broadcast %cst_81 : f32 to vector<8x512xf32>
      %265 = vector.broadcast %cst_82 : f32 to vector<8x512xf32>
      %266 = arith.select %263, %264, %265 : vector<8x512xi1>, vector<8x512xf32>
      %267 = arith.addf %257, %266 : vector<8x512xf32>
      %c24 = arith.constant 24 : index
      %268 = memref.load %arg1[%c24] : memref<32xi32, #tpu.memory_space<smem>>
      %c6_i32 = arith.constant 6 : i32
      %269 = vector.broadcast %c6_i32 : i32 to vector<8x512xi32>
      %270 = arith.cmpi eq, %25, %269 : vector<8x512xi32>
      %271 = vector.broadcast %268 : i32 to vector<8x512xi32>
      %272 = arith.cmpi eq, %26, %271 : vector<8x512xi32>
      %273 = arith.andi %270, %272 : vector<8x512xi1>
      %cst_83 = arith.constant 2.500000e-01 : f32
      %cst_84 = arith.constant 0.000000e+00 : f32
      %274 = vector.broadcast %cst_83 : f32 to vector<8x512xf32>
      %275 = vector.broadcast %cst_84 : f32 to vector<8x512xf32>
      %276 = arith.select %273, %274, %275 : vector<8x512xi1>, vector<8x512xf32>
      %277 = arith.addf %267, %276 : vector<8x512xf32>
      %c25 = arith.constant 25 : index
      %278 = memref.load %arg1[%c25] : memref<32xi32, #tpu.memory_space<smem>>
      %c6_i32_85 = arith.constant 6 : i32
      %279 = vector.broadcast %c6_i32_85 : i32 to vector<8x512xi32>
      %280 = arith.cmpi eq, %25, %279 : vector<8x512xi32>
      %281 = vector.broadcast %278 : i32 to vector<8x512xi32>
      %282 = arith.cmpi eq, %26, %281 : vector<8x512xi32>
      %283 = arith.andi %280, %282 : vector<8x512xi1>
      %cst_86 = arith.constant 2.500000e-01 : f32
      %cst_87 = arith.constant 0.000000e+00 : f32
      %284 = vector.broadcast %cst_86 : f32 to vector<8x512xf32>
      %285 = vector.broadcast %cst_87 : f32 to vector<8x512xf32>
      %286 = arith.select %283, %284, %285 : vector<8x512xi1>, vector<8x512xf32>
      %287 = arith.addf %277, %286 : vector<8x512xf32>
      %c26 = arith.constant 26 : index
      %288 = memref.load %arg1[%c26] : memref<32xi32, #tpu.memory_space<smem>>
      %c6_i32_88 = arith.constant 6 : i32
      %289 = vector.broadcast %c6_i32_88 : i32 to vector<8x512xi32>
      %290 = arith.cmpi eq, %25, %289 : vector<8x512xi32>
      %291 = vector.broadcast %288 : i32 to vector<8x512xi32>
      %292 = arith.cmpi eq, %26, %291 : vector<8x512xi32>
      %293 = arith.andi %290, %292 : vector<8x512xi1>
      %cst_89 = arith.constant 2.500000e-01 : f32
      %cst_90 = arith.constant 0.000000e+00 : f32
      %294 = vector.broadcast %cst_89 : f32 to vector<8x512xf32>
      %295 = vector.broadcast %cst_90 : f32 to vector<8x512xf32>
      %296 = arith.select %293, %294, %295 : vector<8x512xi1>, vector<8x512xf32>
      %297 = arith.addf %287, %296 : vector<8x512xf32>
      %c27 = arith.constant 27 : index
      %298 = memref.load %arg1[%c27] : memref<32xi32, #tpu.memory_space<smem>>
      %c6_i32_91 = arith.constant 6 : i32
      %299 = vector.broadcast %c6_i32_91 : i32 to vector<8x512xi32>
      %300 = arith.cmpi eq, %25, %299 : vector<8x512xi32>
      %301 = vector.broadcast %298 : i32 to vector<8x512xi32>
      %302 = arith.cmpi eq, %26, %301 : vector<8x512xi32>
      %303 = arith.andi %300, %302 : vector<8x512xi1>
      %cst_92 = arith.constant 2.500000e-01 : f32
      %cst_93 = arith.constant 0.000000e+00 : f32
      %304 = vector.broadcast %cst_92 : f32 to vector<8x512xf32>
      %305 = vector.broadcast %cst_93 : f32 to vector<8x512xf32>
      %306 = arith.select %303, %304, %305 : vector<8x512xi1>, vector<8x512xf32>
      %307 = arith.addf %297, %306 : vector<8x512xf32>
      %c28 = arith.constant 28 : index
      %308 = memref.load %arg1[%c28] : memref<32xi32, #tpu.memory_space<smem>>
      %c7_i32 = arith.constant 7 : i32
      %309 = vector.broadcast %c7_i32 : i32 to vector<8x512xi32>
      %310 = arith.cmpi eq, %25, %309 : vector<8x512xi32>
      %311 = vector.broadcast %308 : i32 to vector<8x512xi32>
      %312 = arith.cmpi eq, %26, %311 : vector<8x512xi32>
      %313 = arith.andi %310, %312 : vector<8x512xi1>
      %cst_94 = arith.constant 2.500000e-01 : f32
      %cst_95 = arith.constant 0.000000e+00 : f32
      %314 = vector.broadcast %cst_94 : f32 to vector<8x512xf32>
      %315 = vector.broadcast %cst_95 : f32 to vector<8x512xf32>
      %316 = arith.select %313, %314, %315 : vector<8x512xi1>, vector<8x512xf32>
      %317 = arith.addf %307, %316 : vector<8x512xf32>
      %c29 = arith.constant 29 : index
      %318 = memref.load %arg1[%c29] : memref<32xi32, #tpu.memory_space<smem>>
      %c7_i32_96 = arith.constant 7 : i32
      %319 = vector.broadcast %c7_i32_96 : i32 to vector<8x512xi32>
      %320 = arith.cmpi eq, %25, %319 : vector<8x512xi32>
      %321 = vector.broadcast %318 : i32 to vector<8x512xi32>
      %322 = arith.cmpi eq, %26, %321 : vector<8x512xi32>
      %323 = arith.andi %320, %322 : vector<8x512xi1>
      %cst_97 = arith.constant 2.500000e-01 : f32
      %cst_98 = arith.constant 0.000000e+00 : f32
      %324 = vector.broadcast %cst_97 : f32 to vector<8x512xf32>
      %325 = vector.broadcast %cst_98 : f32 to vector<8x512xf32>
      %326 = arith.select %323, %324, %325 : vector<8x512xi1>, vector<8x512xf32>
      %327 = arith.addf %317, %326 : vector<8x512xf32>
      %c30 = arith.constant 30 : index
      %328 = memref.load %arg1[%c30] : memref<32xi32, #tpu.memory_space<smem>>
      %c7_i32_99 = arith.constant 7 : i32
      %329 = vector.broadcast %c7_i32_99 : i32 to vector<8x512xi32>
      %330 = arith.cmpi eq, %25, %329 : vector<8x512xi32>
      %331 = vector.broadcast %328 : i32 to vector<8x512xi32>
      %332 = arith.cmpi eq, %26, %331 : vector<8x512xi32>
      %333 = arith.andi %330, %332 : vector<8x512xi1>
      %cst_100 = arith.constant 2.500000e-01 : f32
      %cst_101 = arith.constant 0.000000e+00 : f32
      %334 = vector.broadcast %cst_100 : f32 to vector<8x512xf32>
      %335 = vector.broadcast %cst_101 : f32 to vector<8x512xf32>
      %336 = arith.select %333, %334, %335 : vector<8x512xi1>, vector<8x512xf32>
      %337 = arith.addf %327, %336 : vector<8x512xf32>
      %c31 = arith.constant 31 : index
      %338 = memref.load %arg1[%c31] : memref<32xi32, #tpu.memory_space<smem>>
      %c7_i32_102 = arith.constant 7 : i32
      %339 = vector.broadcast %c7_i32_102 : i32 to vector<8x512xi32>
      %340 = arith.cmpi eq, %25, %339 : vector<8x512xi32>
      %341 = vector.broadcast %338 : i32 to vector<8x512xi32>
      %342 = arith.cmpi eq, %26, %341 : vector<8x512xi32>
      %343 = arith.andi %340, %342 : vector<8x512xi1>
      %cst_103 = arith.constant 2.500000e-01 : f32
      %cst_104 = arith.constant 0.000000e+00 : f32
      %344 = vector.broadcast %cst_103 : f32 to vector<8x512xf32>
      %345 = vector.broadcast %cst_104 : f32 to vector<8x512xf32>
      %346 = arith.select %343, %344, %345 : vector<8x512xi1>, vector<8x512xf32>
      %347 = arith.addf %337, %346 : vector<8x512xf32>
      %348 = arith.truncf %347 : vector<8x512xf32> to vector<8x512xbf16>
      %cst_105 = arith.constant dense<0.000000e+00> : vector<8x128xf32>
      %349 = tpu.matmul %348, %24, %cst_105 {dimension_numbers = #tpu.dot_dimension_numbers<[1], [0], [0], [1], [0, 0, 1, 1], [], []>} : vector<8x512xbf16>, vector<512x128xbf16>, vector<8x128xf32> -> vector<8x128xf32>
      %c0_106 = arith.constant 0 : index
      %c0_107 = arith.constant 0 : index
      %350 = vector.load %arg6[%c0_106, %c0_107] : memref<8x128xf32, #tpu.memory_space<vmem>>, vector<8x128xf32>
      tpu.vector_store %arg6[%c0_106, %c0_107], %349 {strides = array<i32>} : memref<8x128xf32, #tpu.memory_space<vmem>>, vector<8x128xf32>,
    } else {
    }
    %c0 = arith.constant 0 : index
    %c0_1 = arith.constant 0 : index
    %3 = vector.load %arg6[%c0, %c0_1] : memref<8x128xf32, #tpu.memory_space<vmem>>, vector<8x128xf32>
    %4 = arith.truncf %3 : vector<8x128xf32> to vector<8x128xbf16>
    %c0_2 = arith.constant 0 : index
    %c0_3 = arith.constant 0 : index
    %5 = vector.load %arg3[%c0_2, %c0_3] : memref<128x256xbf16, #tpu.memory_space<vmem>>, vector<128x256xbf16>
    %cst = arith.constant dense<0.000000e+00> : vector<8x256xf32>
    %6 = tpu.matmul %4, %5, %cst {dimension_numbers = #tpu.dot_dimension_numbers<[1], [0], [0], [1], [0, 0, 1, 1], [], []>} : vector<8x128xbf16>, vector<128x256xbf16>, vector<8x256xf32> -> vector<8x256xf32>
    %c0_4 = arith.constant 0 : index
    %c0_5 = arith.constant 0 : index
    %7 = vector.load %arg4[%c0_4, %c0_5] : memref<1x256xf32, #tpu.memory_space<vmem>>, vector<1x256xf32>
    %8 = vector.broadcast %7 : vector<1x256xf32> to vector<8x256xf32>
    %9 = arith.addf %6, %8 : vector<8x256xf32>
    %c0_6 = arith.constant 0 : index
    %c0_7 = arith.constant 0 : index
    %10 = vector.load %arg5[%c0_6, %c0_7] : memref<8x256xf32, #tpu.memory_space<vmem>>, vector<8x256xf32>
    tpu.vector_store %arg5[%c0_6, %c0_7], %9 {strides = array<i32>} : memref<8x256xf32, #tpu.memory_space<vmem>>, vector<8x256xf32>,
    return
  }
  func.func @transform_0(%arg0: i32, %arg1: memref<32xi32, #tpu.memory_space<smem>>) -> (i32, i32) {
    %c0_i32 = arith.constant 0 : i32
    %c0_i32_0 = arith.constant 0 : i32
    %c0_i32_1 = arith.constant 0 : i32
    return %c0_i32, %c0_i32_0 : i32, i32
  }
  func.func @transform_1(%arg0: i32, %arg1: memref<32xi32, #tpu.memory_space<smem>>) -> (i32, i32) {
    %c0_i32 = arith.constant 0 : i32
    %c0_i32_0 = arith.constant 0 : i32
    return %c0_i32, %arg0 : i32, i32
  }
  func.func @transform_2(%arg0: i32, %arg1: memref<32xi32, #tpu.memory_space<smem>>) -> (i32, i32) {
    %c0_i32 = arith.constant 0 : i32
    %c0_i32_0 = arith.constant 0 : i32
    return %c0_i32, %arg0 : i32, i32
  }
  func.func @transform_3(%arg0: i32, %arg1: memref<32xi32, #tpu.memory_space<smem>>) -> (i32, i32) {
    %c0_i32 = arith.constant 0 : i32
    %c0_i32_0 = arith.constant 0 : i32
    return %c0_i32, %arg0 : i32, i32
  }
}

</mosaic_0001>

<llo_original>
// kernel: tpu_custom_call.1
$region0: #{tpu_custom_call.1}
  #allocation0 [shape = 'u32[]', space=smem, size = 0x4, offset = 0x4, fixed_abs, tag = 'smem constant byte address 0x4 - core index']
  #allocation1 [shape = 'u32[144,128]{1,0:T(1,128)}', space=vmem, size = 0x12000, scoped, tag = 'internal scratch']
  #allocation2 [shape = 'f32[8,128]{1,0:T(8,128)}', space=vmem, size = 0x1000, scoped, tag = 'scratch operand']
  #allocation3 [shape = 's32[1]{0}', space=sflag, size = 0x4, scoped, tag = 'scoped memory for tpu_custom_call.1']
  #allocation4 [shape = 'u8[512]{0}', space=smem, size = 0x200, scoped, tag = 'prefetched SMEM operand 0']
  %s0 = inlined_call_operand.hbm [shape: s32[32], index: 0, kind: input, shape index: {}]
  %s1 = inlined_call_operand.hbm [shape: f32[512,128], index: 1, kind: input, shape index: {}]
  %s2 = inlined_call_operand.hbm [shape: bf16[128,512], index: 2, kind: input, shape index: {}]
  %s3 = inlined_call_operand.vmem [shape: f32[1,512], index: 3, kind: input, shape index: {}]
  %s4 = inlined_call_operand.hbm [shape: f32[8,512], index: 4, kind: output, shape index: {}]
  %s5 = sld [smem:[#allocation0]]
  $region57: #{tpu_custom_call.1} parent=0
    _
  %s7 = ssub.s32 1, %s5
  %s8 = scalar_select 0, %s7, %s5
  %10 = dma.hbm_to_smem %s0, 16, [#allocation4], [#allocation3]
  %11 = dma.done [#allocation3], 16
  %12 = sfence
  $region1: #{tpu_custom_call.1} parent=0
    #allocation5 [shape = 'u8[262144]{0}', space=vmem, size = 0x40000, scoped, tag = 'input window, operand 1, single buffered']
    #allocation6 [shape = 's32[2]{0}', space=sflag, size = 0x8, scoped, tag = 'scoped memory for tpu_custom_call.1']
    #allocation7 [shape = 's32[2]{0}', space=sflag, size = 0x8, scoped, tag = 'scoped memory for tpu_custom_call.1']
    #allocation8 [shape = 'u8[131072]{0}', space=vmem, size = 0x20000, scoped, tag = 'input window, operand 2']
    #allocation9 [shape = 's32[2]{0}', space=sflag, size = 0x8, scoped, tag = 'scoped memory for tpu_custom_call.1']
    #allocation10 [shape = 'u8[16384]{0}', space=vmem, size = 0x4000, scoped, tag = 'output window, operand 0']
    %13 = vsyncpa [#allocation6], 0
    %14 = vsyncpa [#allocation9], 0
    %s15 = scalar_lea.sflag [#allocation9], 1
    %16 = vsyncpa %s15, 0
    %17 = vsyncpa [#allocation7], 0
    %s18 = scalar_lea.sflag [#allocation7], 1
    %19 = vsyncpa %s18, 0
    loop: start=0, step=1, limit=4
    $region2: #{tpu_custom_call.1} parent=1 // loop_pre_header
      _
    $region3: #{tpu_custom_call.1} parent=1 // loop_header
      %s21 = sphi 0, %s25
      %p22 = scmp.ge.s32.totalorder %s21, 4
      %s29 = sphi 0, %s29
      %s31 = sphi 0, %s29
      %s32 = sphi 0, %s31
      %s46 = sphi 0, %s32
      %s52 = sphi 0, %s54
      %s55 = sphi 0, %s52
      %s56 = sphi 0, %s55
      %s72 = sphi 0, %s56
      %s78 = sphi 0, %s80
      %s81 = sphi 0, %s78
      %s82 = sphi 0, %s81
      %s98 = sphi 0, %s82
      %s104 = sphi 0, %s106
      %s107 = sphi 0, %s104
      %s108 = sphi 0, %s107
      %s124 = sphi 0, %s108
    $region4: #{tpu_custom_call.1} parent=1 // loop_header_branch
      %24 = sbr.rel (%p22) target = $region8
    $region5: #{tpu_custom_call.1} parent=1 // loop_body
      %s26 = ssub.s32 %s21, 1
      %s27 = ssub.s32 %s21, 2
      %s28 = sadd.s32 %s21, 1
      %s30 = sadd.s32 %s29, 1
      %p33 = scmp.eq.s32.totalorder %s21, 1
      %p34 = scmp.ne.s32.totalorder %s29, %s31
      %p35 = scmp.eq.s32.totalorder %s21, 0
      %p36 = por %p34, %p35
      %p37 = scmp.ne.s32.totalorder %s29, %s31
      %p38 = scmp.eq.s32.totalorder %s26, 1
      %p39 = por %p37, %p38
      %p40 = scmp.ne.s32.totalorder %s31, %s32
      %p41 = scmp.eq.s32.totalorder %s26, 0
      %p42 = por %p40, %p41
      %p43 = scmp.ne.s32.totalorder %s31, %s32
      %p44 = scmp.eq.s32.totalorder %s27, 1
      %p45 = por %p43, %p44
      %p47 = scmp.ne.s32.totalorder %s32, %s46
      %p48 = scmp.eq.s32.totalorder %s27, 0
      %p49 = por %p47, %p48
      %s50 = ssub.s32 %s21, %s28
      %p51 = scmp.eq.s32.totalorder %s50, 0
      %s53 = sadd.s32 %s52, 1
      %s54 = scalar_select %p51, %s52, %s53
      %p57 = pneg %p51
      %p58 = scmp.eq.s32.totalorder %s21, 1
      %p59 = por %p57, %p58
      %p60 = scmp.ne.s32.totalorder %s52, %s55
      %p61 = scmp.eq.s32.totalorder %s21, 0
      %p62 = por %p60, %p61
      %p63 = scmp.ne.s32.totalorder %s52, %s55
      %p64 = scmp.eq.s32.totalorder %s26, 1
      %p65 = por %p63, %p64
      %p66 = scmp.ne.s32.totalorder %s55, %s56
      %p67 = scmp.eq.s32.totalorder %s26, 0
      %p68 = por %p66, %p67
      %p69 = scmp.ne.s32.totalorder %s55, %s56
      %p70 = scmp.eq.s32.totalorder %s27, 1
      %p71 = por %p69, %p70
      %p73 = scmp.ne.s32.totalorder %s56, %s72
      %p74 = scmp.eq.s32.totalorder %s27, 0
      %p75 = por %p73, %p74
      %s76 = ssub.s32 %s21, %s28
      %p77 = scmp.eq.s32.totalorder %s76, 0
      %s79 = sadd.s32 %s78, 1
      %s80 = scalar_select %p77, %s78, %s79
      %p83 = pneg %p77
      %p84 = scmp.eq.s32.totalorder %s21, 1
      %p85 = por %p83, %p84
      %p86 = scmp.ne.s32.totalorder %s78, %s81
      %p87 = scmp.eq.s32.totalorder %s21, 0
      %p88 = por %p86, %p87
      %p89 = scmp.ne.s32.totalorder %s78, %s81
      %p90 = scmp.eq.s32.totalorder %s26, 1
      %p91 = por %p89, %p90
      %p92 = scmp.ne.s32.totalorder %s81, %s82
      %p93 = scmp.eq.s32.totalorder %s26, 0
      %p94 = por %p92, %p93
      %p95 = scmp.ne.s32.totalorder %s81, %s82
      %p96 = scmp.eq.s32.totalorder %s27, 1
      %p97 = por %p95, %p96
      %p99 = scmp.ne.s32.totalorder %s82, %s98
      %p100 = scmp.eq.s32.totalorder %s27, 0
      %p101 = por %p99, %p100
      %s102 = ssub.s32 %s21, %s28
      %p103 = scmp.eq.s32.totalorder %s102, 0
      %s105 = sadd.s32 %s104, 1
      %s106 = scalar_select %p103, %s104, %s105
      %p109 = pneg %p103
      %p110 = scmp.eq.s32.totalorder %s21, 1
      %p111 = por %p109, %p110
      %p112 = scmp.ne.s32.totalorder %s104, %s107
      %p113 = scmp.eq.s32.totalorder %s21, 0
      %p114 = por %p112, %p113
      %p115 = scmp.ne.s32.totalorder %s104, %s107
      %p116 = scmp.eq.s32.totalorder %s26, 1
      %p117 = por %p115, %p116
      %p118 = scmp.ne.s32.totalorder %s107, %s108
      %p119 = scmp.eq.s32.totalorder %s26, 0
      %p120 = por %p118, %p119
      %p121 = scmp.ne.s32.totalorder %s107, %s108
      %p122 = scmp.eq.s32.totalorder %s27, 1
      %p123 = por %p121, %p122
      %p125 = scmp.ne.s32.totalorder %s108, %s124
      %p126 = scmp.eq.s32.totalorder %s27, 0
      %p127 = por %p125, %p126
      %p128 = scmp.le.s32.totalorder 1, %s21
      %p129 = scmp.lt.s32.totalorder %s21, 3
      %p130 = pnand %p128, %p129
      %p131 = pneg %p130
      // Predicated region
      $region9: #{tpu_custom_call.1} parent=5 // pred_check
        _
      $region10: #{tpu_custom_call.1} parent=5 // pred_check_branch
        %133 = sbr.rel (%p130) target = $region12
      $region11: #{tpu_custom_call.1} parent=5 // pred_region
        %s134 = ssub.s32 %s21, 1
        // Predicated region
        $region13: #{tpu_custom_call.1} parent=11 // pred_check
          %p135 = pneg %p42
        $region14: #{tpu_custom_call.1} parent=11 // pred_check_branch
          %137 = sbr.rel (%p135) target = $region16
        $region15: #{tpu_custom_call.1} parent=11 // pred_region
          %s139 = ssub.s32 8192, 8192
          %140 = vsyncadd [#allocation6], %s139
          %s141 = sshll.u32 [#allocation5], 4
          %s142 = int_to_ptr.vmem [resolvable:$true] %s141
          %147 = dma.hbm_to_vmem [thread:$0]  %s1, 8192, %s142, [#allocation6], 128, 128, 8
        $region16: #{tpu_custom_call.1} parent=11 // pred_fallthru
          _
      $region12: #{tpu_custom_call.1} parent=5 // pred_fallthru
        _
      %p148 = scmp.lt.s32.totalorder %s21, 2
      // Predicated region
      $region17: #{tpu_custom_call.1} parent=5 // pred_check
        %p149 = pneg %p148
      $region18: #{tpu_custom_call.1} parent=5 // pred_check_branch
        %151 = sbr.rel (%p149) target = $region20
      $region19: #{tpu_custom_call.1} parent=5 // pred_region
        // Predicated region
        $region21: #{tpu_custom_call.1} parent=19 // pred_check
          %p152 = pneg %p62
        $region22: #{tpu_custom_call.1} parent=19 // pred_check_branch
          %154 = sbr.rel (%p152) target = $region24
        $region23: #{tpu_custom_call.1} parent=19 // pred_region
          %s155 = sand.u32 %s52, 1
          %s156 = scalar_lea.sflag [#allocation9], %s155
          %s157 = sand.u32 %s52, 1
          %s158 = smul.addr %s157, 128
          %s159 = scalar_lea.vmem [#allocation8], %s158
          %s160 = smul.u32 2, %s21
          %s162 = ssub.s32 2048, 2048
          %163 = vsyncadd %s156, %s162
          %s164 = smul.addr %s160, 64
          %s165 = scalar_lea.hbm %s2, %s164
          %s166 = sshll.u32 %s159, 4
          %s167 = int_to_ptr.vmem [resolvable:$true] %s166
          %172 = dma.hbm_to_vmem [thread:$0]  %s165, 2048, %s167, %s156, 256, 128, 8
        $region24: #{tpu_custom_call.1} parent=19 // pred_fallthru
          _
        // Predicated region
        $region25: #{tpu_custom_call.1} parent=19 // pred_check
          %p173 = pneg %p88
        $region26: #{tpu_custom_call.1} parent=19 // pred_check_branch
          %175 = sbr.rel (%p173) target = $region28
        $region27: #{tpu_custom_call.1} parent=19 // pred_region
          %s176 = smul.u32 2, %s21
          %p177 = scmp.lt.s32.totalorder %s176, 3
          %s178 = scalar_select %p177, %s176, 3
          %s179 = scalar_lea.vmem %s3, %s178
          %s180 = smul.u32 2, %s21
        $region28: #{tpu_custom_call.1} parent=19 // pred_fallthru
          _
      $region20: #{tpu_custom_call.1} parent=5 // pred_fallthru
        _
      %p181 = scmp.le.s32.totalorder 1, %s21
      %p182 = scmp.lt.s32.totalorder %s21, 3
      %p183 = pnand %p181, %p182
      %p184 = pneg %p183
      // Predicated region
      $region29: #{tpu_custom_call.1} parent=5 // pred_check
        _
      $region30: #{tpu_custom_call.1} parent=5 // pred_check_branch
        %186 = sbr.rel (%p183) target = $region32
      $region31: #{tpu_custom_call.1} parent=5 // pred_region
        %s187 = ssub.s32 %s21, 1
        // Predicated region
        $region33: #{tpu_custom_call.1} parent=31 // pred_check
          %p188 = pneg %p42
        $region34: #{tpu_custom_call.1} parent=31 // pred_check_branch
          %190 = sbr.rel (%p188) target = $region36
        $region35: #{tpu_custom_call.1} parent=31 // pred_region
          %191 = dma.done [#allocation6], 8192
        $region36: #{tpu_custom_call.1} parent=31 // pred_fallthru
          _
        %s192 = sand.u32 %s55, 1
        %s193 = scalar_lea.sflag [#allocation9], %s192
        %s194 = sand.u32 %s55, 1
        %s195 = smul.addr %s194, 128
        %s196 = scalar_lea.vmem [#allocation8], %s195
        // Predicated region
        $region37: #{tpu_custom_call.1} parent=31 // pred_check
          %p197 = pneg %p68
        $region38: #{tpu_custom_call.1} parent=31 // pred_check_branch
          %199 = sbr.rel (%p197) target = $region40
        $region39: #{tpu_custom_call.1} parent=31 // pred_region
          %200 = dma.done %s193, 2048
        $region40: #{tpu_custom_call.1} parent=31 // pred_fallthru
          _
        %p201 = pneg %p42
        %p202 = pneg %p39
        %s203 = sand.u32 %s55, 1
        %s204 = scalar_lea.sflag [#allocation9], %s203
        %s205 = sand.u32 %s55, 1
        %s206 = smul.addr %s205, 128
        %s207 = scalar_lea.vmem [#allocation8], %s206
        %p208 = pneg %p68
        %p209 = pneg %p65
        %s210 = smul.u32 2, %s26
        %p211 = scmp.lt.s32.totalorder %s210, 3
        %s212 = scalar_select %p211, %s210, 3
        %s213 = scalar_lea.vmem %s3, %s212
        %p214 = pneg %p94
        %p215 = pneg %p91
        %p216 = pneg %p120
        %p217 = pneg %p117
        %s218 = sand.u32 %s107, 1
        %s219 = scalar_lea.sflag [#allocation7], %s218
        %s220 = sand.u32 %s107, 1
        %s221 = smul.addr %s220, 16
        %s222 = scalar_lea.vmem [#allocation10], %s221
        %s223 = smul.u32 2, %s26
        %s224 = smul.u32 2, %s26
        %p225 = scmp.lt.s32.totalorder %s224, 3
        %s226 = scalar_select %p225, %s224, 3
        %s227 = scalar_lea.vmem %s3, %s226
        %s228 = smul.u32 2, %s26
        %s229 = smul.u32 2, %s26
        %p231 = scmp.eq.s32.totalorder %s26, 0
        // Predicated region
        $region41: #{tpu_custom_call.1} parent=31 // pred_check
          %p232 = pneg %p231
        $region42: #{tpu_custom_call.1} parent=31 // pred_check_branch
          %234 = sbr.rel (%p232) target = $region44
        $region43: #{tpu_custom_call.1} parent=31 // pred_region
          %v235 = vld [vmem:[#allocation5] sm:$0xff]
          %v236 = vld [vmem:[#allocation5 + $0x8] sm:$0xff]
          %v237 = vld [vmem:[#allocation5 + $0x10] sm:$0xff]
          %v238 = vld [vmem:[#allocation5 + $0x18] sm:$0xff]
          %v239 = vld [vmem:[#allocation5 + $0x20] sm:$0xff]
          %v240 = vld [vmem:[#allocation5 + $0x28] sm:$0xff]
          %v241 = vld [vmem:[#allocation5 + $0x30] sm:$0xff]
          %v242 = vld [vmem:[#allocation5 + $0x38] sm:$0xff]
          %v243 = vld [vmem:[#allocation5 + $0x40] sm:$0xff]
          %v244 = vld [vmem:[#allocation5 + $0x48] sm:$0xff]
          %v245 = vld [vmem:[#allocation5 + $0x50] sm:$0xff]
          %v246 = vld [vmem:[#allocation5 + $0x58] sm:$0xff]
          %v247 = vld [vmem:[#allocation5 + $0x60] sm:$0xff]
          %v248 = vld [vmem:[#allocation5 + $0x68] sm:$0xff]
          %v249 = vld [vmem:[#allocation5 + $0x70] sm:$0xff]
          %v250 = vld [vmem:[#allocation5 + $0x78] sm:$0xff]
          %v251 = vld [vmem:[#allocation5 + $0x80] sm:$0xff]
          %v252 = vld [vmem:[#allocation5 + $0x88] sm:$0xff]
          %v253 = vld [vmem:[#allocation5 + $0x90] sm:$0xff]
          %v254 = vld [vmem:[#allocation5 + $0x98] sm:$0xff]
          %v255 = vld [vmem:[#allocation5 + $0xa0] sm:$0xff]
          %v256 = vld [vmem:[#allocation5 + $0xa8] sm:$0xff]
          %v257 = vld [vmem:[#allocation5 + $0xb0] sm:$0xff]
          %v258 = vld [vmem:[#allocation5 + $0xb8] sm:$0xff]
          %v259 = vld [vmem:[#allocation5 + $0xc0] sm:$0xff]
          %v260 = vld [vmem:[#allocation5 + $0xc8] sm:$0xff]
          %v261 = vld [vmem:[#allocation5 + $0xd0] sm:$0xff]
          %v262 = vld [vmem:[#allocation5 + $0xd8] sm:$0xff]
          %v263 = vld [vmem:[#allocation5 + $0xe0] sm:$0xff]
          %v264 = vld [vmem:[#allocation5 + $0xe8] sm:$0xff]
          %v265 = vld [vmem:[#allocation5 + $0xf0] sm:$0xff]
          %v266 = vld [vmem:[#allocation5 + $0xf8] sm:$0xff]
          %v267 = vld [vmem:[#allocation5 + $0x100] sm:$0xff]
          %v268 = vld [vmem:[#allocation5 + $0x108] sm:$0xff]
          %v269 = vld [vmem:[#allocation5 + $0x110] sm:$0xff]
          %v270 = vld [vmem:[#allocation5 + $0x118] sm:$0xff]
          %v271 = vld [vmem:[#allocation5 + $0x120] sm:$0xff]
          %v272 = vld [vmem:[#allocation5 + $0x128] sm:$0xff]
          %v273 = vld [vmem:[#allocation5 + $0x130] sm:$0xff]
          %v274 = vld [vmem:[#allocation5 + $0x138] sm:$0xff]
          %v275 = vld [vmem:[#allocation5 + $0x140] sm:$0xff]
          %v276 = vld [vmem:[#allocation5 + $0x148] sm:$0xff]
          %v277 = vld [vmem:[#allocation5 + $0x150] sm:$0xff]
          %v278 = vld [vmem:[#allocation5 + $0x158] sm:$0xff]
          %v279 = vld [vmem:[#allocation5 + $0x160] sm:$0xff]
          %v280 = vld [vmem:[#allocation5 + $0x168] sm:$0xff]
          %v281 = vld [vmem:[#allocation5 + $0x170] sm:$0xff]
          %v282 = vld [vmem:[#allocation5 + $0x178] sm:$0xff]
          %v283 = vld [vmem:[#allocation5 + $0x180] sm:$0xff]
          %v284 = vld [vmem:[#allocation5 + $0x188] sm:$0xff]
          %v285 = vld [vmem:[#allocation5 + $0x190] sm:$0xff]
          %v286 = vld [vmem:[#allocation5 + $0x198] sm:$0xff]
          %v287 = vld [vmem:[#allocation5 + $0x1a0] sm:$0xff]
          %v288 = vld [vmem:[#allocation5 + $0x1a8] sm:$0xff]
          %v289 = vld [vmem:[#allocation5 + $0x1b0] sm:$0xff]
          %v290 = vld [vmem:[#allocation5 + $0x1b8] sm:$0xff]
          %v291 = vld [vmem:[#allocation5 + $0x1c0] sm:$0xff]
          %v292 = vld [vmem:[#allocation5 + $0x1c8] sm:$0xff]
          %v293 = vld [vmem:[#allocation5 + $0x1d0] sm:$0xff]
          %v294 = vld [vmem:[#allocation5 + $0x1d8] sm:$0xff]
          %v295 = vld [vmem:[#allocation5 + $0x1e0] sm:$0xff]
          %v296 = vld [vmem:[#allocation5 + $0x1e8] sm:$0xff]
          %v297 = vld [vmem:[#allocation5 + $0x1f0] sm:$0xff]
          %v298 = vld [vmem:[#allocation5 + $0x1f8] sm:$0xff]
          %v299 = vmul.f32 %v235, %v235
          %v300 = vmul.f32 %v236, %v236
          %v301 = vmul.f32 %v237, %v237
          %v302 = vmul.f32 %v238, %v238
          %v303 = vmul.f32 %v239, %v239
          %v304 = vmul.f32 %v240, %v240
          %v305 = vmul.f32 %v241, %v241
          %v306 = vmul.f32 %v242, %v242
          %v307 = vmul.f32 %v243, %v243
          %v308 = vmul.f32 %v244, %v244
          %v309 = vmul.f32 %v245, %v245
          %v310 = vmul.f32 %v246, %v246
          %v311 = vmul.f32 %v247, %v247
          %v312 = vmul.f32 %v248, %v248
          %v313 = vmul.f32 %v249, %v249
          %v314 = vmul.f32 %v250, %v250
          %v315 = vmul.f32 %v251, %v251
          %v316 = vmul.f32 %v252, %v252
          %v317 = vmul.f32 %v253, %v253
          %v318 = vmul.f32 %v254, %v254
          %v319 = vmul.f32 %v255, %v255
          %v320 = vmul.f32 %v256, %v256
          %v321 = vmul.f32 %v257, %v257
          %v322 = vmul.f32 %v258, %v258
          %v323 = vmul.f32 %v259, %v259
          %v324 = vmul.f32 %v260, %v260
          %v325 = vmul.f32 %v261, %v261
          %v326 = vmul.f32 %v262, %v262
          %v327 = vmul.f32 %v263, %v263
          %v328 = vmul.f32 %v264, %v264
          %v329 = vmul.f32 %v265, %v265
          %v330 = vmul.f32 %v266, %v266
          %v331 = vmul.f32 %v267, %v267
          %v332 = vmul.f32 %v268, %v268
          %v333 = vmul.f32 %v269, %v269
          %v334 = vmul.f32 %v270, %v270
          %v335 = vmul.f32 %v271, %v271
          %v336 = vmul.f32 %v272, %v272
          %v337 = vmul.f32 %v273, %v273
          %v338 = vmul.f32 %v274, %v274
          %v339 = vmul.f32 %v275, %v275
          %v340 = vmul.f32 %v276, %v276
          %v341 = vmul.f32 %v277, %v277
          %v342 = vmul.f32 %v278, %v278
          %v343 = vmul.f32 %v279, %v279
          %v344 = vmul.f32 %v280, %v280
          %v345 = vmul.f32 %v281, %v281
          %v346 = vmul.f32 %v282, %v282
          %v347 = vmul.f32 %v283, %v283
          %v348 = vmul.f32 %v284, %v284
          %v349 = vmul.f32 %v285, %v285
          %v350 = vmul.f32 %v286, %v286
          %v351 = vmul.f32 %v287, %v287
          %v352 = vmul.f32 %v288, %v288
          %v353 = vmul.f32 %v289, %v289
          %v354 = vmul.f32 %v290, %v290
          %v355 = vmul.f32 %v291, %v291
          %v356 = vmul.f32 %v292, %v292
          %v357 = vmul.f32 %v293, %v293
          %v358 = vmul.f32 %v294, %v294
          %v359 = vmul.f32 %v295, %v295
          %v360 = vmul.f32 %v296, %v296
          %v361 = vmul.f32 %v297, %v297
          %v362 = vmul.f32 %v298, %v298
          %363 = vadd.xlane.f32.xlu0 %v299
          %v364 = vpop.xlane.xlu0 %363
          %365 = vadd.xlane.f32.xlu0 %v300
          %v366 = vpop.xlane.xlu0 %365
          %367 = vadd.xlane.f32.xlu0 %v301
          %v368 = vpop.xlane.xlu0 %367
          %369 = vadd.xlane.f32.xlu0 %v302
          %v370 = vpop.xlane.xlu0 %369
          %371 = vadd.xlane.f32.xlu0 %v303
          %v372 = vpop.xlane.xlu0 %371
          %373 = vadd.xlane.f32.xlu0 %v304
          %v374 = vpop.xlane.xlu0 %373
          %375 = vadd.xlane.f32.xlu0 %v305
          %v376 = vpop.xlane.xlu0 %375
          %377 = vadd.xlane.f32.xlu0 %v306
          %v378 = vpop.xlane.xlu0 %377
          %379 = vadd.xlane.f32.xlu0 %v307
          %v380 = vpop.xlane.xlu0 %379
          %381 = vadd.xlane.f32.xlu0 %v308
          %v382 = vpop.xlane.xlu0 %381
          %383 = vadd.xlane.f32.xlu0 %v309
          %v384 = vpop.xlane.xlu0 %383
          %385 = vadd.xlane.f32.xlu0 %v310
          %v386 = vpop.xlane.xlu0 %385
          %387 = vadd.xlane.f32.xlu0 %v311
          %v388 = vpop.xlane.xlu0 %387
          %389 = vadd.xlane.f32.xlu0 %v312
          %v390 = vpop.xlane.xlu0 %389
          %391 = vadd.xlane.f32.xlu0 %v313
          %v392 = vpop.xlane.xlu0 %391
          %393 = vadd.xlane.f32.xlu0 %v314
          %v394 = vpop.xlane.xlu0 %393
          %395 = vadd.xlane.f32.xlu0 %v315
          %v396 = vpop.xlane.xlu0 %395
          %397 = vadd.xlane.f32.xlu0 %v316
          %v398 = vpop.xlane.xlu0 %397
          %399 = vadd.xlane.f32.xlu0 %v317
          %v400 = vpop.xlane.xlu0 %399
          %401 = vadd.xlane.f32.xlu0 %v318
          %v402 = vpop.xlane.xlu0 %401
          %403 = vadd.xlane.f32.xlu0 %v319
          %v404 = vpop.xlane.xlu0 %403
          %405 = vadd.xlane.f32.xlu0 %v320
          %v406 = vpop.xlane.xlu0 %405
          %407 = vadd.xlane.f32.xlu0 %v321
          %v408 = vpop.xlane.xlu0 %407
          %409 = vadd.xlane.f32.xlu0 %v322
          %v410 = vpop.xlane.xlu0 %409
          %411 = vadd.xlane.f32.xlu0 %v323
          %v412 = vpop.xlane.xlu0 %411
          %413 = vadd.xlane.f32.xlu0 %v324
          %v414 = vpop.xlane.xlu0 %413
          %415 = vadd.xlane.f32.xlu0 %v325
          %v416 = vpop.xlane.xlu0 %415
          %417 = vadd.xlane.f32.xlu0 %v326
          %v418 = vpop.xlane.xlu0 %417
          %419 = vadd.xlane.f32.xlu0 %v327
          %v420 = vpop.xlane.xlu0 %419
          %421 = vadd.xlane.f32.xlu0 %v328
          %v422 = vpop.xlane.xlu0 %421
          %423 = vadd.xlane.f32.xlu0 %v329
          %v424 = vpop.xlane.xlu0 %423
          %425 = vadd.xlane.f32.xlu0 %v330
          %v426 = vpop.xlane.xlu0 %425
          %427 = vadd.xlane.f32.xlu0 %v331
          %v428 = vpop.xlane.xlu0 %427
          %429 = vadd.xlane.f32.xlu0 %v332
          %v430 = vpop.xlane.xlu0 %429
          %431 = vadd.xlane.f32.xlu0 %v333
          %v432 = vpop.xlane.xlu0 %431
          %433 = vadd.xlane.f32.xlu0 %v334
          %v434 = vpop.xlane.xlu0 %433
          %435 = vadd.xlane.f32.xlu0 %v335
          %v436 = vpop.xlane.xlu0 %435
          %437 = vadd.xlane.f32.xlu0 %v336
          %v438 = vpop.xlane.xlu0 %437
          %439 = vadd.xlane.f32.xlu0 %v337
          %v440 = vpop.xlane.xlu0 %439
          %441 = vadd.xlane.f32.xlu0 %v338
          %v442 = vpop.xlane.xlu0 %441
          %443 = vadd.xlane.f32.xlu0 %v339
          %v444 = vpop.xlane.xlu0 %443
          %445 = vadd.xlane.f32.xlu0 %v340
          %v446 = vpop.xlane.xlu0 %445
          %447 = vadd.xlane.f32.xlu0 %v341
          %v448 = vpop.xlane.xlu0 %447
          %449 = vadd.xlane.f32.xlu0 %v342
          %v450 = vpop.xlane.xlu0 %449
          %451 = vadd.xlane.f32.xlu0 %v343
          %v452 = vpop.xlane.xlu0 %451
          %453 = vadd.xlane.f32.xlu0 %v344
          %v454 = vpop.xlane.xlu0 %453
          %455 = vadd.xlane.f32.xlu0 %v345
          %v456 = vpop.xlane.xlu0 %455
          %457 = vadd.xlane.f32.xlu0 %v346
          %v458 = vpop.xlane.xlu0 %457
          %459 = vadd.xlane.f32.xlu0 %v347
          %v460 = vpop.xlane.xlu0 %459
          %461 = vadd.xlane.f32.xlu0 %v348
          %v462 = vpop.xlane.xlu0 %461
          %463 = vadd.xlane.f32.xlu0 %v349
          %v464 = vpop.xlane.xlu0 %463
          %465 = vadd.xlane.f32.xlu0 %v350
          %v466 = vpop.xlane.xlu0 %465
          %467 = vadd.xlane.f32.xlu0 %v351
          %v468 = vpop.xlane.xlu0 %467
          %469 = vadd.xlane.f32.xlu0 %v352
          %v470 = vpop.xlane.xlu0 %469
          %471 = vadd.xlane.f32.xlu0 %v353
          %v472 = vpop.xlane.xlu0 %471
          %473 = vadd.xlane.f32.xlu0 %v354
          %v474 = vpop.xlane.xlu0 %473
          %475 = vadd.xlane.f32.xlu0 %v355
          %v476 = vpop.xlane.xlu0 %475
          %477 = vadd.xlane.f32.xlu0 %v356
          %v478 = vpop.xlane.xlu0 %477
          %479 = vadd.xlane.f32.xlu0 %v357
          %v480 = vpop.xlane.xlu0 %479
          %481 = vadd.xlane.f32.xlu0 %v358
          %v482 = vpop.xlane.xlu0 %481
          %483 = vadd.xlane.f32.xlu0 %v359
          %v484 = vpop.xlane.xlu0 %483
          %485 = vadd.xlane.f32.xlu0 %v360
          %v486 = vpop.xlane.xlu0 %485
          %487 = vadd.xlane.f32.xlu0 %v361
          %v488 = vpop.xlane.xlu0 %487
          %489 = vadd.xlane.f32.xlu0 %v362
          %v490 = vpop.xlane.xlu0 %489
          %vm491 = vcmp.gt.f32.partialorder %v364, 1.0
          %vm492 = vcmp.gt.f32.partialorder %v366, 1.0
          %vm493 = vcmp.gt.f32.partialorder %v368, 1.0
          %vm494 = vcmp.gt.f32.partialorder %v370, 1.0
          %vm495 = vcmp.gt.f32.partialorder %v372, 1.0
          %vm496 = vcmp.gt.f32.partialorder %v374, 1.0
          %vm497 = vcmp.gt.f32.partialorder %v376, 1.0
          %vm498 = vcmp.gt.f32.partialorder %v378, 1.0
          %vm499 = vcmp.gt.f32.partialorder %v380, 1.0
          %vm500 = vcmp.gt.f32.partialorder %v382, 1.0
          %vm501 = vcmp.gt.f32.partialorder %v384, 1.0
          %vm502 = vcmp.gt.f32.partialorder %v386, 1.0
          %vm503 = vcmp.gt.f32.partialorder %v388, 1.0
          %vm504 = vcmp.gt.f32.partialorder %v390, 1.0
          %vm505 = vcmp.gt.f32.partialorder %v392, 1.0
          %vm506 = vcmp.gt.f32.partialorder %v394, 1.0
          %vm507 = vcmp.gt.f32.partialorder %v396, 1.0
          %vm508 = vcmp.gt.f32.partialorder %v398, 1.0
          %vm509 = vcmp.gt.f32.partialorder %v400, 1.0
          %vm510 = vcmp.gt.f32.partialorder %v402, 1.0
          %vm511 = vcmp.gt.f32.partialorder %v404, 1.0
          %vm512 = vcmp.gt.f32.partialorder %v406, 1.0
          %vm513 = vcmp.gt.f32.partialorder %v408, 1.0
          %vm514 = vcmp.gt.f32.partialorder %v410, 1.0
          %vm515 = vcmp.gt.f32.partialorder %v412, 1.0
          %vm516 = vcmp.gt.f32.partialorder %v414, 1.0
          %vm517 = vcmp.gt.f32.partialorder %v416, 1.0
          %vm518 = vcmp.gt.f32.partialorder %v418, 1.0
          %vm519 = vcmp.gt.f32.partialorder %v420, 1.0
          %vm520 = vcmp.gt.f32.partialorder %v422, 1.0
          %vm521 = vcmp.gt.f32.partialorder %v424, 1.0
          %vm522 = vcmp.gt.f32.partialorder %v426, 1.0
          %vm523 = vcmp.gt.f32.partialorder %v428, 1.0
          %vm524 = vcmp.gt.f32.partialorder %v430, 1.0
          %vm525 = vcmp.gt.f32.partialorder %v432, 1.0
          %vm526 = vcmp.gt.f32.partialorder %v434, 1.0
          %vm527 = vcmp.gt.f32.partialorder %v436, 1.0
          %vm528 = vcmp.gt.f32.partialorder %v438, 1.0
          %vm529 = vcmp.gt.f32.partialorder %v440, 1.0
          %vm530 = vcmp.gt.f32.partialorder %v442, 1.0
          %vm531 = vcmp.gt.f32.partialorder %v444, 1.0
          %vm532 = vcmp.gt.f32.partialorder %v446, 1.0
          %vm533 = vcmp.gt.f32.partialorder %v448, 1.0
          %vm534 = vcmp.gt.f32.partialorder %v450, 1.0
          %vm535 = vcmp.gt.f32.partialorder %v452, 1.0
          %vm536 = vcmp.gt.f32.partialorder %v454, 1.0
          %vm537 = vcmp.gt.f32.partialorder %v456, 1.0
          %vm538 = vcmp.gt.f32.partialorder %v458, 1.0
          %vm539 = vcmp.gt.f32.partialorder %v460, 1.0
          %vm540 = vcmp.gt.f32.partialorder %v462, 1.0
          %vm541 = vcmp.gt.f32.partialorder %v464, 1.0
          %vm542 = vcmp.gt.f32.partialorder %v466, 1.0
          %vm543 = vcmp.gt.f32.partialorder %v468, 1.0
          %vm544 = vcmp.gt.f32.partialorder %v470, 1.0
          %vm545 = vcmp.gt.f32.partialorder %v472, 1.0
          %vm546 = vcmp.gt.f32.partialorder %v474, 1.0
          %vm547 = vcmp.gt.f32.partialorder %v476, 1.0
          %vm548 = vcmp.gt.f32.partialorder %v478, 1.0
          %vm549 = vcmp.gt.f32.partialorder %v480, 1.0
          %vm550 = vcmp.gt.f32.partialorder %v482, 1.0
          %vm551 = vcmp.gt.f32.partialorder %v484, 1.0
          %vm552 = vcmp.gt.f32.partialorder %v486, 1.0
          %vm553 = vcmp.gt.f32.partialorder %v488, 1.0
          %vm554 = vcmp.gt.f32.partialorder %v490, 1.0
          %v555 = vrsqrt.pop %v364
          %v556 = vrsqrt.pop %v366
          %v557 = vrsqrt.pop %v368
          %v558 = vrsqrt.pop %v370
          %v559 = vrsqrt.pop %v372
          %v560 = vrsqrt.pop %v374
          %v561 = vrsqrt.pop %v376
          %v562 = vrsqrt.pop %v378
          %v563 = vrsqrt.pop %v380
          %v564 = vrsqrt.pop %v382
          %v565 = vrsqrt.pop %v384
          %v566 = vrsqrt.pop %v386
          %v567 = vrsqrt.pop %v388
          %v568 = vrsqrt.pop %v390
          %v569 = vrsqrt.pop %v392
          %v570 = vrsqrt.pop %v394
          %v571 = vrsqrt.pop %v396
          %v572 = vrsqrt.pop %v398
          %v573 = vrsqrt.pop %v400
          %v574 = vrsqrt.pop %v402
          %v575 = vrsqrt.pop %v404
          %v576 = vrsqrt.pop %v406
          %v577 = vrsqrt.pop %v408
          %v578 = vrsqrt.pop %v410
          %v579 = vrsqrt.pop %v412
          %v580 = vrsqrt.pop %v414
          %v581 = vrsqrt.pop %v416
          %v582 = vrsqrt.pop %v418
          %v583 = vrsqrt.pop %v420
          %v584 = vrsqrt.pop %v422
          %v585 = vrsqrt.pop %v424
          %v586 = vrsqrt.pop %v426
          %v587 = vrsqrt.pop %v428
          %v588 = vrsqrt.pop %v430
          %v589 = vrsqrt.pop %v432
          %v590 = vrsqrt.pop %v434
          %v591 = vrsqrt.pop %v436
          %v592 = vrsqrt.pop %v438
          %v593 = vrsqrt.pop %v440
          %v594 = vrsqrt.pop %v442
          %v595 = vrsqrt.pop %v444
          %v596 = vrsqrt.pop %v446
          %v597 = vrsqrt.pop %v448
          %v598 = vrsqrt.pop %v450
          %v599 = vrsqrt.pop %v452
          %v600 = vrsqrt.pop %v454
          %v601 = vrsqrt.pop %v456
          %v602 = vrsqrt.pop %v458
          %v603 = vrsqrt.pop %v460
          %v604 = vrsqrt.pop %v462
          %v605 = vrsqrt.pop %v464
          %v606 = vrsqrt.pop %v466
          %v607 = vrsqrt.pop %v468
          %v608 = vrsqrt.pop %v470
          %v609 = vrsqrt.pop %v472
          %v610 = vrsqrt.pop %v474
          %v611 = vrsqrt.pop %v476
          %v612 = vrsqrt.pop %v478
          %v613 = vrsqrt.pop %v480
          %v614 = vrsqrt.pop %v482
          %v615 = vrsqrt.pop %v484
          %v616 = vrsqrt.pop %v486
          %v617 = vrsqrt.pop %v488
          %v618 = vrsqrt.pop %v490
          %v619 = vsel %vm491, %v555, 1.0
          %v620 = vsel %vm492, %v556, 1.0
          %v621 = vsel %vm493, %v557, 1.0
          %v622 = vsel %vm494, %v558, 1.0
          %v623 = vsel %vm495, %v559, 1.0
          %v624 = vsel %vm496, %v560, 1.0
          %v625 = vsel %vm497, %v561, 1.0
          %v626 = vsel %vm498, %v562, 1.0
          %v627 = vsel %vm499, %v563, 1.0
          %v628 = vsel %vm500, %v564, 1.0
          %v629 = vsel %vm501, %v565, 1.0
          %v630 = vsel %vm502, %v566, 1.0
          %v631 = vsel %vm503, %v567, 1.0
          %v632 = vsel %vm504, %v568, 1.0
          %v633 = vsel %vm505, %v569, 1.0
          %v634 = vsel %vm506, %v570, 1.0
          %v635 = vsel %vm507, %v571, 1.0
          %v636 = vsel %vm508, %v572, 1.0
          %v637 = vsel %vm509, %v573, 1.0
          %v638 = vsel %vm510, %v574, 1.0
          %v639 = vsel %vm511, %v575, 1.0
          %v640 = vsel %vm512, %v576, 1.0
          %v641 = vsel %vm513, %v577, 1.0
          %v642 = vsel %vm514, %v578, 1.0
          %v643 = vsel %vm515, %v579, 1.0
          %v644 = vsel %vm516, %v580, 1.0
          %v645 = vsel %vm517, %v581, 1.0
          %v646 = vsel %vm518, %v582, 1.0
          %v647 = vsel %vm519, %v583, 1.0
          %v648 = vsel %vm520, %v584, 1.0
          %v649 = vsel %vm521, %v585, 1.0
          %v650 = vsel %vm522, %v586, 1.0
          %v651 = vsel %vm523, %v587, 1.0
          %v652 = vsel %vm524, %v588, 1.0
          %v653 = vsel %vm525, %v589, 1.0
          %v654 = vsel %vm526, %v590, 1.0
          %v655 = vsel %vm527, %v591, 1.0
          %v656 = vsel %vm528, %v592, 1.0
          %v657 = vsel %vm529, %v593, 1.0
          %v658 = vsel %vm530, %v594, 1.0
          %v659 = vsel %vm531, %v595, 1.0
          %v660 = vsel %vm532, %v596, 1.0
          %v661 = vsel %vm533, %v597, 1.0
          %v662 = vsel %vm534, %v598, 1.0
          %v663 = vsel %vm535, %v599, 1.0
          %v664 = vsel %vm536, %v600, 1.0
          %v665 = vsel %vm537, %v601, 1.0
          %v666 = vsel %vm538, %v602, 1.0
          %v667 = vsel %vm539, %v603, 1.0
          %v668 = vsel %vm540, %v604, 1.0
          %v669 = vsel %vm541, %v605, 1.0
          %v670 = vsel %vm542, %v606, 1.0
          %v671 = vsel %vm543, %v607, 1.0
          %v672 = vsel %vm544, %v608, 1.0
          %v673 = vsel %vm545, %v609, 1.0
          %v674 = vsel %vm546, %v610, 1.0
          %v675 = vsel %vm547, %v611, 1.0
          %v676 = vsel %vm548, %v612, 1.0
          %v677 = vsel %vm549, %v613, 1.0
          %v678 = vsel %vm550, %v614, 1.0
          %v679 = vsel %vm551, %v615, 1.0
          %v680 = vsel %vm552, %v616, 1.0
          %v681 = vsel %vm553, %v617, 1.0
          %v682 = vsel %vm554, %v618, 1.0
          %v683 = vmul.f32 %v235, %v619
          %v684 = vmul.f32 %v236, %v620
          %v685 = vmul.f32 %v237, %v621
          %v686 = vmul.f32 %v238, %v622
          %v687 = vmul.f32 %v239, %v623
          %v688 = vmul.f32 %v240, %v624
          %v689 = vmul.f32 %v241, %v625
          %v690 = vmul.f32 %v242, %v626
          %v691 = vmul.f32 %v243, %v627
          %v692 = vmul.f32 %v244, %v628
          %v693 = vmul.f32 %v245, %v629
          %v694 = vmul.f32 %v246, %v630
          %v695 = vmul.f32 %v247, %v631
          %v696 = vmul.f32 %v248, %v632
          %v697 = vmul.f32 %v249, %v633
          %v698 = vmul.f32 %v250, %v634
          %v699 = vmul.f32 %v251, %v635
          %v700 = vmul.f32 %v252, %v636
          %v701 = vmul.f32 %v253, %v637
          %v702 = vmul.f32 %v254, %v638
          %v703 = vmul.f32 %v255, %v639
          %v704 = vmul.f32 %v256, %v640
          %v705 = vmul.f32 %v257, %v641
          %v706 = vmul.f32 %v258, %v642
          %v707 = vmul.f32 %v259, %v643
          %v708 = vmul.f32 %v260, %v644
          %v709 = vmul.f32 %v261, %v645
          %v710 = vmul.f32 %v262, %v646
          %v711 = vmul.f32 %v263, %v647
          %v712 = vmul.f32 %v264, %v648
          %v713 = vmul.f32 %v265, %v649
          %v714 = vmul.f32 %v266, %v650
          %v715 = vmul.f32 %v267, %v651
          %v716 = vmul.f32 %v268, %v652
          %v717 = vmul.f32 %v269, %v653
          %v718 = vmul.f32 %v270, %v654
          %v719 = vmul.f32 %v271, %v655
          %v720 = vmul.f32 %v272, %v656
          %v721 = vmul.f32 %v273, %v657
          %v722 = vmul.f32 %v274, %v658
          %v723 = vmul.f32 %v275, %v659
          %v724 = vmul.f32 %v276, %v660
          %v725 = vmul.f32 %v277, %v661
          %v726 = vmul.f32 %v278, %v662
          %v727 = vmul.f32 %v279, %v663
          %v728 = vmul.f32 %v280, %v664
          %v729 = vmul.f32 %v281, %v665
          %v730 = vmul.f32 %v282, %v666
          %v731 = vmul.f32 %v283, %v667
          %v732 = vmul.f32 %v284, %v668
          %v733 = vmul.f32 %v285, %v669
          %v734 = vmul.f32 %v286, %v670
          %v735 = vmul.f32 %v287, %v671
          %v736 = vmul.f32 %v288, %v672
          %v737 = vmul.f32 %v289, %v673
          %v738 = vmul.f32 %v290, %v674
          %v739 = vmul.f32 %v291, %v675
          %v740 = vmul.f32 %v292, %v676
          %v741 = vmul.f32 %v293, %v677
          %v742 = vmul.f32 %v294, %v678
          %v743 = vmul.f32 %v295, %v679
          %v744 = vmul.f32 %v296, %v680
          %v745 = vmul.f32 %v297, %v681
          %v746 = vmul.f32 %v298, %v682
          %v747 = vpack.c.bf16 %v684, %v683
          %v748 = vpack.c.bf16 %v686, %v685
          %v749 = vpack.c.bf16 %v688, %v687
          %v750 = vpack.c.bf16 %v690, %v689
          %v751 = vpack.c.bf16 %v692, %v691
          %v752 = vpack.c.bf16 %v694, %v693
          %v753 = vpack.c.bf16 %v696, %v695
          %v754 = vpack.c.bf16 %v698, %v697
          %v755 = vpack.c.bf16 %v700, %v699
          %v756 = vpack.c.bf16 %v702, %v701
          %v757 = vpack.c.bf16 %v704, %v703
          %v758 = vpack.c.bf16 %v706, %v705
          %v759 = vpack.c.bf16 %v708, %v707
          %v760 = vpack.c.bf16 %v710, %v709
          %v761 = vpack.c.bf16 %v712, %v711
          %v762 = vpack.c.bf16 %v714, %v713
          %v763 = vpack.c.bf16 %v716, %v715
          %v764 = vpack.c.bf16 %v718, %v717
          %v765 = vpack.c.bf16 %v720, %v719
          %v766 = vpack.c.bf16 %v722, %v721
          %v767 = vpack.c.bf16 %v724, %v723
          %v768 = vpack.c.bf16 %v726, %v725
          %v769 = vpack.c.bf16 %v728, %v727
          %v770 = vpack.c.bf16 %v730, %v729
          %v771 = vpack.c.bf16 %v732, %v731
          %v772 = vpack.c.bf16 %v734, %v733
          %v773 = vpack.c.bf16 %v736, %v735
          %v774 = vpack.c.bf16 %v738, %v737
          %v775 = vpack.c.bf16 %v740, %v739
          %v776 = vpack.c.bf16 %v742, %v741
          %v777 = vpack.c.bf16 %v744, %v743
          %v778 = vpack.c.bf16 %v746, %v745
          %v779 = vlaneseq
          %v780 = vshrl.u32 %v779, 7
          %v781 = vlaneseq
          %v782 = vand.u32 %v781, 127
          %v783 = vadd.s32 %v782, 128
          %v784 = vadd.s32 %v782, 256
          %v785 = vadd.s32 %v782, 384
          %s786 = sld [smem:[#allocation4]]
          %vm787 = vcmp.eq.s32.totalorder %v780, 0
          %v788 = vstv %s786
          %vm789 = vcmp.eq.s32.totalorder %v782, %v788
          %vm790 = vcmp.eq.s32.totalorder %v783, %v788
          %vm791 = vcmp.eq.s32.totalorder %v784, %v788
          %vm792 = vcmp.eq.s32.totalorder %v785, %v788
          %vm793 = vmand %vm787, %vm789
          %vm794 = vmand %vm787, %vm790
          %vm795 = vmand %vm787, %vm791
          %vm796 = vmand %vm787, %vm792
          %v797 = vsel %vm793, 0.25, 0.0
          %v798 = vsel %vm794, 0.25, 0.0
          %v799 = vsel %vm795, 0.25, 0.0
          %v800 = vsel %vm796, 0.25, 0.0
          %v801 = vadd.f32 %v797, 0.0
          %v802 = vadd.f32 %v798, 0.0
          %v803 = vadd.f32 %v799, 0.0
          %v804 = vadd.f32 %v800, 0.0
          %s805 = sld [smem:[#allocation4 + $0x1]]
          %v806 = vstv %s805
          %vm807 = vcmp.eq.s32.totalorder %v782, %v806
          %vm808 = vcmp.eq.s32.totalorder %v783, %v806
          %vm809 = vcmp.eq.s32.totalorder %v784, %v806
          %vm810 = vcmp.eq.s32.totalorder %v785, %v806
          %vm811 = vmand %vm787, %vm807
          %vm812 = vmand %vm787, %vm808
          %vm813 = vmand %vm787, %vm809
          %vm814 = vmand %vm787, %vm810
          %v815 = vsel %vm811, 0.25, 0.0
          %v816 = vsel %vm812, 0.25, 0.0
          %v817 = vsel %vm813, 0.25, 0.0
          %v818 = vsel %vm814, 0.25, 0.0
          %v819 = vadd.f32 %v801, %v815
          %v820 = vadd.f32 %v802, %v816
          %v821 = vadd.f32 %v803, %v817
          %v822 = vadd.f32 %v804, %v818
          %s823 = sld [smem:[#allocation4 + $0x2]]
          %v824 = vstv %s823
          %vm825 = vcmp.eq.s32.totalorder %v782, %v824
          %vm826 = vcmp.eq.s32.totalorder %v783, %v824
          %vm827 = vcmp.eq.s32.totalorder %v784, %v824
          %vm828 = vcmp.eq.s32.totalorder %v785, %v824
          %vm829 = vmand %vm787, %vm825
          %vm830 = vmand %vm787, %vm826
          %vm831 = vmand %vm787, %vm827
          %vm832 = vmand %vm787, %vm828
          %v833 = vsel %vm829, 0.25, 0.0
          %v834 = vsel %vm830, 0.25, 0.0
          %v835 = vsel %vm831, 0.25, 0.0
          %v836 = vsel %vm832, 0.25, 0.0
          %v837 = vadd.f32 %v819, %v833
          %v838 = vadd.f32 %v820, %v834
          %v839 = vadd.f32 %v821, %v835
          %v840 = vadd.f32 %v822, %v836
          %s841 = sld [smem:[#allocation4 + $0x3]]
          %v842 = vstv %s841
          %vm843 = vcmp.eq.s32.totalorder %v782, %v842
          %vm844 = vcmp.eq.s32.totalorder %v783, %v842
          %vm845 = vcmp.eq.s32.totalorder %v784, %v842
          %vm846 = vcmp.eq.s32.totalorder %v785, %v842
          %vm847 = vmand %vm787, %vm843
          %vm848 = vmand %vm787, %vm844
          %vm849 = vmand %vm787, %vm845
          %vm850 = vmand %vm787, %vm846
          %v851 = vsel %vm847, 0.25, 0.0
          %v852 = vsel %vm848, 0.25, 0.0
          %v853 = vsel %vm849, 0.25, 0.0
          %v854 = vsel %vm850, 0.25, 0.0
          %v855 = vadd.f32 %v837, %v851
          %v856 = vadd.f32 %v838, %v852
          %v857 = vadd.f32 %v839, %v853
          %v858 = vadd.f32 %v840, %v854
          %s859 = sld [smem:[#allocation4 + $0x4]]
          %vm860 = vcmp.eq.s32.totalorder %v780, 1
          %v861 = vstv %s859
          %vm862 = vcmp.eq.s32.totalorder %v782, %v861
          %vm863 = vcmp.eq.s32.totalorder %v783, %v861
          %vm864 = vcmp.eq.s32.totalorder %v784, %v861
          %vm865 = vcmp.eq.s32.totalorder %v785, %v861
          %vm866 = vmand %vm860, %vm862
          %vm867 = vmand %vm860, %vm863
          %vm868 = vmand %vm860, %vm864
          %vm869 = vmand %vm860, %vm865
          %v870 = vsel %vm866, 0.25, 0.0
          %v871 = vsel %vm867, 0.25, 0.0
          %v872 = vsel %vm868, 0.25, 0.0
          %v873 = vsel %vm869, 0.25, 0.0
          %v874 = vadd.f32 %v855, %v870
          %v875 = vadd.f32 %v856, %v871
          %v876 = vadd.f32 %v857, %v872
          %v877 = vadd.f32 %v858, %v873
          %s878 = sld [smem:[#allocation4 + $0x5]]
          %v879 = vstv %s878
          %vm880 = vcmp.eq.s32.totalorder %v782, %v879
          %vm881 = vcmp.eq.s32.totalorder %v783, %v879
          %vm882 = vcmp.eq.s32.totalorder %v784, %v879
          %vm883 = vcmp.eq.s32.totalorder %v785, %v879
          %vm884 = vmand %vm860, %vm880
          %vm885 = vmand %vm860, %vm881
          %vm886 = vmand %vm860, %vm882
          %vm887 = vmand %vm860, %vm883
          %v888 = vsel %vm884, 0.25, 0.0
          %v889 = vsel %vm885, 0.25, 0.0
          %v890 = vsel %vm886, 0.25, 0.0
          %v891 = vsel %vm887, 0.25, 0.0
          %v892 = vadd.f32 %v874, %v888
          %v893 = vadd.f32 %v875, %v889
          %v894 = vadd.f32 %v876, %v890
          %v895 = vadd.f32 %v877, %v891
          %s896 = sld [smem:[#allocation4 + $0x6]]
          %v897 = vstv %s896
          %vm898 = vcmp.eq.s32.totalorder %v782, %v897
          %vm899 = vcmp.eq.s32.totalorder %v783, %v897
          %vm900 = vcmp.eq.s32.totalorder %v784, %v897
          %vm901 = vcmp.eq.s32.totalorder %v785, %v897
          %vm902 = vmand %vm860, %vm898
          %vm903 = vmand %vm860, %vm899
          %vm904 = vmand %vm860, %vm900
          %vm905 = vmand %vm860, %vm901
          %v906 = vsel %vm902, 0.25, 0.0
          %v907 = vsel %vm903, 0.25, 0.0
          %v908 = vsel %vm904, 0.25, 0.0
          %v909 = vsel %vm905, 0.25, 0.0
          %v910 = vadd.f32 %v892, %v906
          %v911 = vadd.f32 %v893, %v907
          %v912 = vadd.f32 %v894, %v908
          %v913 = vadd.f32 %v895, %v909
          %s914 = sld [smem:[#allocation4 + $0x7]]
          %v915 = vstv %s914
          %vm916 = vcmp.eq.s32.totalorder %v782, %v915
          %vm917 = vcmp.eq.s32.totalorder %v783, %v915
          %vm918 = vcmp.eq.s32.totalorder %v784, %v915
          %vm919 = vcmp.eq.s32.totalorder %v785, %v915
          %vm920 = vmand %vm860, %vm916
          %vm921 = vmand %vm860, %vm917
          %vm922 = vmand %vm860, %vm918
          %vm923 = vmand %vm860, %vm919
          %v924 = vsel %vm920, 0.25, 0.0
          %v925 = vsel %vm921, 0.25, 0.0
          %v926 = vsel %vm922, 0.25, 0.0
          %v927 = vsel %vm923, 0.25, 0.0
          %v928 = vadd.f32 %v910, %v924
          %v929 = vadd.f32 %v911, %v925
          %v930 = vadd.f32 %v912, %v926
          %v931 = vadd.f32 %v913, %v927
          %s932 = sld [smem:[#allocation4 + $0x8]]
          %vm933 = vcmp.eq.s32.totalorder %v780, 2
          %v934 = vstv %s932
          %vm935 = vcmp.eq.s32.totalorder %v782, %v934
          %vm936 = vcmp.eq.s32.totalorder %v783, %v934
          %vm937 = vcmp.eq.s32.totalorder %v784, %v934
          %vm938 = vcmp.eq.s32.totalorder %v785, %v934
          %vm939 = vmand %vm933, %vm935
          %vm940 = vmand %vm933, %vm936
          %vm941 = vmand %vm933, %vm937
          %vm942 = vmand %vm933, %vm938
          %v943 = vsel %vm939, 0.25, 0.0
          %v944 = vsel %vm940, 0.25, 0.0
          %v945 = vsel %vm941, 0.25, 0.0
          %v946 = vsel %vm942, 0.25, 0.0
          %v947 = vadd.f32 %v928, %v943
          %v948 = vadd.f32 %v929, %v944
          %v949 = vadd.f32 %v930, %v945
          %v950 = vadd.f32 %v931, %v946
          %s951 = sld [smem:[#allocation4 + $0x9]]
          %v952 = vstv %s951
          %vm953 = vcmp.eq.s32.totalorder %v782, %v952
          %vm954 = vcmp.eq.s32.totalorder %v783, %v952
          %vm955 = vcmp.eq.s32.totalorder %v784, %v952
          %vm956 = vcmp.eq.s32.totalorder %v785, %v952
          %vm957 = vmand %vm933, %vm953
          %vm958 = vmand %vm933, %vm954
          %vm959 = vmand %vm933, %vm955
          %vm960 = vmand %vm933, %vm956
          %v961 = vsel %vm957, 0.25, 0.0
          %v962 = vsel %vm958, 0.25, 0.0
          %v963 = vsel %vm959, 0.25, 0.0
          %v964 = vsel %vm960, 0.25, 0.0
          %v965 = vadd.f32 %v947, %v961
          %v966 = vadd.f32 %v948, %v962
          %v967 = vadd.f32 %v949, %v963
          %v968 = vadd.f32 %v950, %v964
          %s969 = sld [smem:[#allocation4 + $0xa]]
          %v970 = vstv %s969
          %vm971 = vcmp.eq.s32.totalorder %v782, %v970
          %vm972 = vcmp.eq.s32.totalorder %v783, %v970
          %vm973 = vcmp.eq.s32.totalorder %v784, %v970
          %vm974 = vcmp.eq.s32.totalorder %v785, %v970
          %vm975 = vmand %vm933, %vm971
          %vm976 = vmand %vm933, %vm972
          %vm977 = vmand %vm933, %vm973
          %vm978 = vmand %vm933, %vm974
          %v979 = vsel %vm975, 0.25, 0.0
          %v980 = vsel %vm976, 0.25, 0.0
          %v981 = vsel %vm977, 0.25, 0.0
          %v982 = vsel %vm978, 0.25, 0.0
          %v983 = vadd.f32 %v965, %v979
          %v984 = vadd.f32 %v966, %v980
          %v985 = vadd.f32 %v967, %v981
          %v986 = vadd.f32 %v968, %v982
          %s987 = sld [smem:[#allocation4 + $0xb]]
          %v988 = vstv %s987
          %vm989 = vcmp.eq.s32.totalorder %v782, %v988
          %vm990 = vcmp.eq.s32.totalorder %v783, %v988
          %vm991 = vcmp.eq.s32.totalorder %v784, %v988
          %vm992 = vcmp.eq.s32.totalorder %v785, %v988
          %vm993 = vmand %vm933, %vm989
          %vm994 = vmand %vm933, %vm990
          %vm995 = vmand %vm933, %vm991
          %vm996 = vmand %vm933, %vm992
          %v997 = vsel %vm993, 0.25, 0.0
          %v998 = vsel %vm994, 0.25, 0.0
          %v999 = vsel %vm995, 0.25, 0.0
          %v1000 = vsel %vm996, 0.25, 0.0
          %v1001 = vadd.f32 %v983, %v997
          %v1002 = vadd.f32 %v984, %v998
          %v1003 = vadd.f32 %v985, %v999
          %v1004 = vadd.f32 %v986, %v1000
          %s1005 = sld [smem:[#allocation4 + $0xc]]
          %vm1006 = vcmp.eq.s32.totalorder %v780, 3
          %v1007 = vstv %s1005
          %vm1008 = vcmp.eq.s32.totalorder %v782, %v1007
          %vm1009 = vcmp.eq.s32.totalorder %v783, %v1007
          %vm1010 = vcmp.eq.s32.totalorder %v784, %v1007
          %vm1011 = vcmp.eq.s32.totalorder %v785, %v1007
          %vm1012 = vmand %vm1006, %vm1008
          %vm1013 = vmand %vm1006, %vm1009
          %vm1014 = vmand %vm1006, %vm1010
          %vm1015 = vmand %vm1006, %vm1011
          %v1016 = vsel %vm1012, 0.25, 0.0
          %v1017 = vsel %vm1013, 0.25, 0.0
          %v1018 = vsel %vm1014, 0.25, 0.0
          %v1019 = vsel %vm1015, 0.25, 0.0
          %v1020 = vadd.f32 %v1001, %v1016
          %v1021 = vadd.f32 %v1002, %v1017
          %v1022 = vadd.f32 %v1003, %v1018
          %v1023 = vadd.f32 %v1004, %v1019
          %s1024 = sld [smem:[#allocation4 + $0xd]]
          %v1025 = vstv %s1024
          %vm1026 = vcmp.eq.s32.totalorder %v782, %v1025
          %vm1027 = vcmp.eq.s32.totalorder %v783, %v1025
          %vm1028 = vcmp.eq.s32.totalorder %v784, %v1025
          %vm1029 = vcmp.eq.s32.totalorder %v785, %v1025
          %vm1030 = vmand %vm1006, %vm1026
          %vm1031 = vmand %vm1006, %vm1027
          %vm1032 = vmand %vm1006, %vm1028
          %vm1033 = vmand %vm1006, %vm1029
          %v1034 = vsel %vm1030, 0.25, 0.0
          %v1035 = vsel %vm1031, 0.25, 0.0
          %v1036 = vsel %vm1032, 0.25, 0.0
          %v1037 = vsel %vm1033, 0.25, 0.0
          %v1038 = vadd.f32 %v1020, %v1034
          %v1039 = vadd.f32 %v1021, %v1035
          %v1040 = vadd.f32 %v1022, %v1036
          %v1041 = vadd.f32 %v1023, %v1037
          %s1042 = sld [smem:[#allocation4 + $0xe]]
          %v1043 = vstv %s1042
          %vm1044 = vcmp.eq.s32.totalorder %v782, %v1043
          %vm1045 = vcmp.eq.s32.totalorder %v783, %v1043
          %vm1046 = vcmp.eq.s32.totalorder %v784, %v1043
          %vm1047 = vcmp.eq.s32.totalorder %v785, %v1043
          %vm1048 = vmand %vm1006, %vm1044
          %vm1049 = vmand %vm1006, %vm1045
          %vm1050 = vmand %vm1006, %vm1046
          %vm1051 = vmand %vm1006, %vm1047
          %v1052 = vsel %vm1048, 0.25, 0.0
          %v1053 = vsel %vm1049, 0.25, 0.0
          %v1054 = vsel %vm1050, 0.25, 0.0
          %v1055 = vsel %vm1051, 0.25, 0.0
          %v1056 = vadd.f32 %v1038, %v1052
          %v1057 = vadd.f32 %v1039, %v1053
          %v1058 = vadd.f32 %v1040, %v1054
          %v1059 = vadd.f32 %v1041, %v1055
          %s1060 = sld [smem:[#allocation4 + $0xf]]
          %v1061 = vstv %s1060
          %vm1062 = vcmp.eq.s32.totalorder %v782, %v1061
          %vm1063 = vcmp.eq.s32.totalorder %v783, %v1061
          %vm1064 = vcmp.eq.s32.totalorder %v784, %v1061
          %vm1065 = vcmp.eq.s32.totalorder %v785, %v1061
          %vm1066 = vmand %vm1006, %vm1062
          %vm1067 = vmand %vm1006, %vm1063
          %vm1068 = vmand %vm1006, %vm1064
          %vm1069 = vmand %vm1006, %vm1065
          %v1070 = vsel %vm1066, 0.25, 0.0
          %v1071 = vsel %vm1067, 0.25, 0.0
          %v1072 = vsel %vm1068, 0.25, 0.0
          %v1073 = vsel %vm1069, 0.25, 0.0
          %v1074 = vadd.f32 %v1056, %v1070
          %v1075 = vadd.f32 %v1057, %v1071
          %v1076 = vadd.f32 %v1058, %v1072
          %v1077 = vadd.f32 %v1059, %v1073
          %s1078 = sld [smem:[#allocation4 + $0x10]]
          %vm1079 = vcmp.eq.s32.totalorder %v780, 4
          %v1080 = vstv %s1078
          %vm1081 = vcmp.eq.s32.totalorder %v782, %v1080
          %vm1082 = vcmp.eq.s32.totalorder %v783, %v1080
          %vm1083 = vcmp.eq.s32.totalorder %v784, %v1080
          %vm1084 = vcmp.eq.s32.totalorder %v785, %v1080
          %vm1085 = vmand %vm1079, %vm1081
          %vm1086 = vmand %vm1079, %vm1082
          %vm1087 = vmand %vm1079, %vm1083
          %vm1088 = vmand %vm1079, %vm1084
          %v1089 = vsel %vm1085, 0.25, 0.0
          %v1090 = vsel %vm1086, 0.25, 0.0
          %v1091 = vsel %vm1087, 0.25, 0.0
          %v1092 = vsel %vm1088, 0.25, 0.0
          %v1093 = vadd.f32 %v1074, %v1089
          %v1094 = vadd.f32 %v1075, %v1090
          %v1095 = vadd.f32 %v1076, %v1091
          %v1096 = vadd.f32 %v1077, %v1092
          %s1097 = sld [smem:[#allocation4 + $0x11]]
          %v1098 = vstv %s1097
          %vm1099 = vcmp.eq.s32.totalorder %v782, %v1098
          %vm1100 = vcmp.eq.s32.totalorder %v783, %v1098
          %vm1101 = vcmp.eq.s32.totalorder %v784, %v1098
          %vm1102 = vcmp.eq.s32.totalorder %v785, %v1098
          %vm1103 = vmand %vm1079, %vm1099
          %vm1104 = vmand %vm1079, %vm1100
          %vm1105 = vmand %vm1079, %vm1101
          %vm1106 = vmand %vm1079, %vm1102
          %v1107 = vsel %vm1103, 0.25, 0.0
          %v1108 = vsel %vm1104, 0.25, 0.0
          %v1109 = vsel %vm1105, 0.25, 0.0
          %v1110 = vsel %vm1106, 0.25, 0.0
          %v1111 = vadd.f32 %v1093, %v1107
          %v1112 = vadd.f32 %v1094, %v1108
          %v1113 = vadd.f32 %v1095, %v1109
          %v1114 = vadd.f32 %v1096, %v1110
          %s1115 = sld [smem:[#allocation4 + $0x12]]
          %v1116 = vstv %s1115
          %vm1117 = vcmp.eq.s32.totalorder %v782, %v1116
          %vm1118 = vcmp.eq.s32.totalorder %v783, %v1116
          %vm1119 = vcmp.eq.s32.totalorder %v784, %v1116
          %vm1120 = vcmp.eq.s32.totalorder %v785, %v1116
          %vm1121 = vmand %vm1079, %vm1117
          %vm1122 = vmand %vm1079, %vm1118
          %vm1123 = vmand %vm1079, %vm1119
          %vm1124 = vmand %vm1079, %vm1120
          %v1125 = vsel %vm1121, 0.25, 0.0
          %v1126 = vsel %vm1122, 0.25, 0.0
          %v1127 = vsel %vm1123, 0.25, 0.0
          %v1128 = vsel %vm1124, 0.25, 0.0
          %v1129 = vadd.f32 %v1111, %v1125
          %v1130 = vadd.f32 %v1112, %v1126
          %v1131 = vadd.f32 %v1113, %v1127
          %v1132 = vadd.f32 %v1114, %v1128
          %s1133 = sld [smem:[#allocation4 + $0x13]]
          %v1134 = vstv %s1133
          %vm1135 = vcmp.eq.s32.totalorder %v782, %v1134
          %vm1136 = vcmp.eq.s32.totalorder %v783, %v1134
          %vm1137 = vcmp.eq.s32.totalorder %v784, %v1134
          %vm1138 = vcmp.eq.s32.totalorder %v785, %v1134
          %vm1139 = vmand %vm1079, %vm1135
          %vm1140 = vmand %vm1079, %vm1136
          %vm1141 = vmand %vm1079, %vm1137
          %vm1142 = vmand %vm1079, %vm1138
          %v1143 = vsel %vm1139, 0.25, 0.0
          %v1144 = vsel %vm1140, 0.25, 0.0
          %v1145 = vsel %vm1141, 0.25, 0.0
          %v1146 = vsel %vm1142, 0.25, 0.0
          %v1147 = vadd.f32 %v1129, %v1143
          %v1148 = vadd.f32 %v1130, %v1144
          %v1149 = vadd.f32 %v1131, %v1145
          %v1150 = vadd.f32 %v1132, %v1146
          %s1151 = sld [smem:[#allocation4 + $0x14]]
          %vm1152 = vcmp.eq.s32.totalorder %v780, 5
          %v1153 = vstv %s1151
          %vm1154 = vcmp.eq.s32.totalorder %v782, %v1153
          %vm1155 = vcmp.eq.s32.totalorder %v783, %v1153
          %vm1156 = vcmp.eq.s32.totalorder %v784, %v1153
          %vm1157 = vcmp.eq.s32.totalorder %v785, %v1153
          %vm1158 = vmand %vm1152, %vm1154
          %vm1159 = vmand %vm1152, %vm1155
          %vm1160 = vmand %vm1152, %vm1156
          %vm1161 = vmand %vm1152, %vm1157
          %v1162 = vsel %vm1158, 0.25, 0.0
          %v1163 = vsel %vm1159, 0.25, 0.0
          %v1164 = vsel %vm1160, 0.25, 0.0
          %v1165 = vsel %vm1161, 0.25, 0.0
          %v1166 = vadd.f32 %v1147, %v1162
          %v1167 = vadd.f32 %v1148, %v1163
          %v1168 = vadd.f32 %v1149, %v1164
          %v1169 = vadd.f32 %v1150, %v1165
          %s1170 = sld [smem:[#allocation4 + $0x15]]
          %v1171 = vstv %s1170
          %vm1172 = vcmp.eq.s32.totalorder %v782, %v1171
          %vm1173 = vcmp.eq.s32.totalorder %v783, %v1171
          %vm1174 = vcmp.eq.s32.totalorder %v784, %v1171
          %vm1175 = vcmp.eq.s32.totalorder %v785, %v1171
          %vm1176 = vmand %vm1152, %vm1172
          %vm1177 = vmand %vm1152, %vm1173
          %vm1178 = vmand %vm1152, %vm1174
          %vm1179 = vmand %vm1152, %vm1175
          %v1180 = vsel %vm1176, 0.25, 0.0
          %v1181 = vsel %vm1177, 0.25, 0.0
          %v1182 = vsel %vm1178, 0.25, 0.0
          %v1183 = vsel %vm1179, 0.25, 0.0
          %v1184 = vadd.f32 %v1166, %v1180
          %v1185 = vadd.f32 %v1167, %v1181
          %v1186 = vadd.f32 %v1168, %v1182
          %v1187 = vadd.f32 %v1169, %v1183
          %s1188 = sld [smem:[#allocation4 + $0x16]]
          %v1189 = vstv %s1188
          %vm1190 = vcmp.eq.s32.totalorder %v782, %v1189
          %vm1191 = vcmp.eq.s32.totalorder %v783, %v1189
          %vm1192 = vcmp.eq.s32.totalorder %v784, %v1189
          %vm1193 = vcmp.eq.s32.totalorder %v785, %v1189
          %vm1194 = vmand %vm1152, %vm1190
          %vm1195 = vmand %vm1152, %vm1191
          %vm1196 = vmand %vm1152, %vm1192
          %vm1197 = vmand %vm1152, %vm1193
          %v1198 = vsel %vm1194, 0.25, 0.0
          %v1199 = vsel %vm1195, 0.25, 0.0
          %v1200 = vsel %vm1196, 0.25, 0.0
          %v1201 = vsel %vm1197, 0.25, 0.0
          %v1202 = vadd.f32 %v1184, %v1198
          %v1203 = vadd.f32 %v1185, %v1199
          %v1204 = vadd.f32 %v1186, %v1200
          %v1205 = vadd.f32 %v1187, %v1201
          %s1206 = sld [smem:[#allocation4 + $0x17]]
          %v1207 = vstv %s1206
          %vm1208 = vcmp.eq.s32.totalorder %v782, %v1207
          %vm1209 = vcmp.eq.s32.totalorder %v783, %v1207
          %vm1210 = vcmp.eq.s32.totalorder %v784, %v1207
          %vm1211 = vcmp.eq.s32.totalorder %v785, %v1207
          %vm1212 = vmand %vm1152, %vm1208
          %vm1213 = vmand %vm1152, %vm1209
          %vm1214 = vmand %vm1152, %vm1210
          %vm1215 = vmand %vm1152, %vm1211
          %v1216 = vsel %vm1212, 0.25, 0.0
          %v1217 = vsel %vm1213, 0.25, 0.0
          %v1218 = vsel %vm1214, 0.25, 0.0
          %v1219 = vsel %vm1215, 0.25, 0.0
          %v1220 = vadd.f32 %v1202, %v1216
          %v1221 = vadd.f32 %v1203, %v1217
          %v1222 = vadd.f32 %v1204, %v1218
          %v1223 = vadd.f32 %v1205, %v1219
          %s1224 = sld [smem:[#allocation4 + $0x18]]
          %vm1225 = vcmp.eq.s32.totalorder %v780, 6
          %v1226 = vstv %s1224
          %vm1227 = vcmp.eq.s32.totalorder %v782, %v1226
          %vm1228 = vcmp.eq.s32.totalorder %v783, %v1226
          %vm1229 = vcmp.eq.s32.totalorder %v784, %v1226
          %vm1230 = vcmp.eq.s32.totalorder %v785, %v1226
          %vm1231 = vmand %vm1225, %vm1227
          %vm1232 = vmand %vm1225, %vm1228
          %vm1233 = vmand %vm1225, %vm1229
          %vm1234 = vmand %vm1225, %vm1230
          %v1235 = vsel %vm1231, 0.25, 0.0
          %v1236 = vsel %vm1232, 0.25, 0.0
          %v1237 = vsel %vm1233, 0.25, 0.0
          %v1238 = vsel %vm1234, 0.25, 0.0
          %v1239 = vadd.f32 %v1220, %v1235
          %v1240 = vadd.f32 %v1221, %v1236
          %v1241 = vadd.f32 %v1222, %v1237
          %v1242 = vadd.f32 %v1223, %v1238
          %s1243 = sld [smem:[#allocation4 + $0x19]]
          %v1244 = vstv %s1243
          %vm1245 = vcmp.eq.s32.totalorder %v782, %v1244
          %vm1246 = vcmp.eq.s32.totalorder %v783, %v1244
          %vm1247 = vcmp.eq.s32.totalorder %v784, %v1244
          %vm1248 = vcmp.eq.s32.totalorder %v785, %v1244
          %vm1249 = vmand %vm1225, %vm1245
          %vm1250 = vmand %vm1225, %vm1246
          %vm1251 = vmand %vm1225, %vm1247
          %vm1252 = vmand %vm1225, %vm1248
          %v1253 = vsel %vm1249, 0.25, 0.0
          %v1254 = vsel %vm1250, 0.25, 0.0
          %v1255 = vsel %vm1251, 0.25, 0.0
          %v1256 = vsel %vm1252, 0.25, 0.0
          %v1257 = vadd.f32 %v1239, %v1253
          %v1258 = vadd.f32 %v1240, %v1254
          %v1259 = vadd.f32 %v1241, %v1255
          %v1260 = vadd.f32 %v1242, %v1256
          %s1261 = sld [smem:[#allocation4 + $0x1a]]
          %v1262 = vstv %s1261
          %vm1263 = vcmp.eq.s32.totalorder %v782, %v1262
          %vm1264 = vcmp.eq.s32.totalorder %v783, %v1262
          %vm1265 = vcmp.eq.s32.totalorder %v784, %v1262
          %vm1266 = vcmp.eq.s32.totalorder %v785, %v1262
          %vm1267 = vmand %vm1225, %vm1263
          %vm1268 = vmand %vm1225, %vm1264
          %vm1269 = vmand %vm1225, %vm1265
          %vm1270 = vmand %vm1225, %vm1266
          %v1271 = vsel %vm1267, 0.25, 0.0
          %v1272 = vsel %vm1268, 0.25, 0.0
          %v1273 = vsel %vm1269, 0.25, 0.0
          %v1274 = vsel %vm1270, 0.25, 0.0
          %v1275 = vadd.f32 %v1257, %v1271
          %v1276 = vadd.f32 %v1258, %v1272
          %v1277 = vadd.f32 %v1259, %v1273
          %v1278 = vadd.f32 %v1260, %v1274
          %s1279 = sld [smem:[#allocation4 + $0x1b]]
          %v1280 = vstv %s1279
          %vm1281 = vcmp.eq.s32.totalorder %v782, %v1280
          %vm1282 = vcmp.eq.s32.totalorder %v783, %v1280
          %vm1283 = vcmp.eq.s32.totalorder %v784, %v1280
          %vm1284 = vcmp.eq.s32.totalorder %v785, %v1280
          %vm1285 = vmand %vm1225, %vm1281
          %vm1286 = vmand %vm1225, %vm1282
          %vm1287 = vmand %vm1225, %vm1283
          %vm1288 = vmand %vm1225, %vm1284
          %v1289 = vsel %vm1285, 0.25, 0.0
          %v1290 = vsel %vm1286, 0.25, 0.0
          %v1291 = vsel %vm1287, 0.25, 0.0
          %v1292 = vsel %vm1288, 0.25, 0.0
          %v1293 = vadd.f32 %v1275, %v1289
          %v1294 = vadd.f32 %v1276, %v1290
          %v1295 = vadd.f32 %v1277, %v1291
          %v1296 = vadd.f32 %v1278, %v1292
          %s1297 = sld [smem:[#allocation4 + $0x1c]]
          %vm1298 = vcmp.eq.s32.totalorder %v780, 7
          %v1299 = vstv %s1297
          %vm1300 = vcmp.eq.s32.totalorder %v782, %v1299
          %vm1301 = vcmp.eq.s32.totalorder %v783, %v1299
          %vm1302 = vcmp.eq.s32.totalorder %v784, %v1299
          %vm1303 = vcmp.eq.s32.totalorder %v785, %v1299
          %vm1304 = vmand %vm1298, %vm1300
          %vm1305 = vmand %vm1298, %vm1301
          %vm1306 = vmand %vm1298, %vm1302
          %vm1307 = vmand %vm1298, %vm1303
          %v1308 = vsel %vm1304, 0.25, 0.0
          %v1309 = vsel %vm1305, 0.25, 0.0
          %v1310 = vsel %vm1306, 0.25, 0.0
          %v1311 = vsel %vm1307, 0.25, 0.0
          %v1312 = vadd.f32 %v1293, %v1308
          %v1313 = vadd.f32 %v1294, %v1309
          %v1314 = vadd.f32 %v1295, %v1310
          %v1315 = vadd.f32 %v1296, %v1311
          %s1316 = sld [smem:[#allocation4 + $0x1d]]
          %v1317 = vstv %s1316
          %vm1318 = vcmp.eq.s32.totalorder %v782, %v1317
          %vm1319 = vcmp.eq.s32.totalorder %v783, %v1317
          %vm1320 = vcmp.eq.s32.totalorder %v784, %v1317
          %vm1321 = vcmp.eq.s32.totalorder %v785, %v1317
          %vm1322 = vmand %vm1298, %vm1318
          %vm1323 = vmand %vm1298, %vm1319
          %vm1324 = vmand %vm1298, %vm1320
          %vm1325 = vmand %vm1298, %vm1321
          %v1326 = vsel %vm1322, 0.25, 0.0
          %v1327 = vsel %vm1323, 0.25, 0.0
          %v1328 = vsel %vm1324, 0.25, 0.0
          %v1329 = vsel %vm1325, 0.25, 0.0
          %v1330 = vadd.f32 %v1312, %v1326
          %v1331 = vadd.f32 %v1313, %v1327
          %v1332 = vadd.f32 %v1314, %v1328
          %v1333 = vadd.f32 %v1315, %v1329
          %s1334 = sld [smem:[#allocation4 + $0x1e]]
          %v1335 = vstv %s1334
          %vm1336 = vcmp.eq.s32.totalorder %v782, %v1335
          %vm1337 = vcmp.eq.s32.totalorder %v783, %v1335
          %vm1338 = vcmp.eq.s32.totalorder %v784, %v1335
          %vm1339 = vcmp.eq.s32.totalorder %v785, %v1335
          %vm1340 = vmand %vm1298, %vm1336
          %vm1341 = vmand %vm1298, %vm1337
          %vm1342 = vmand %vm1298, %vm1338
          %vm1343 = vmand %vm1298, %vm1339
          %v1344 = vsel %vm1340, 0.25, 0.0
          %v1345 = vsel %vm1341, 0.25, 0.0
          %v1346 = vsel %vm1342, 0.25, 0.0
          %v1347 = vsel %vm1343, 0.25, 0.0
          %v1348 = vadd.f32 %v1330, %v1344
          %v1349 = vadd.f32 %v1331, %v1345
          %v1350 = vadd.f32 %v1332, %v1346
          %v1351 = vadd.f32 %v1333, %v1347
          %s1352 = sld [smem:[#allocation4 + $0x1f]]
          %v1353 = vstv %s1352
          %vm1354 = vcmp.eq.s32.totalorder %v782, %v1353
          %vm1355 = vcmp.eq.s32.totalorder %v783, %v1353
          %vm1356 = vcmp.eq.s32.totalorder %v784, %v1353
          %vm1357 = vcmp.eq.s32.totalorder %v785, %v1353
          %vm1358 = vmand %vm1298, %vm1354
          %vm1359 = vmand %vm1298, %vm1355
          %vm1360 = vmand %vm1298, %vm1356
          %vm1361 = vmand %vm1298, %vm1357
          %v1362 = vsel %vm1358, 0.25, 0.0
          %v1363 = vsel %vm1359, 0.25, 0.0
          %v1364 = vsel %vm1360, 0.25, 0.0
          %v1365 = vsel %vm1361, 0.25, 0.0
          %v1366 = vadd.f32 %v1348, %v1362
          %v1367 = vadd.f32 %v1349, %v1363
          %v1368 = vadd.f32 %v1350, %v1364
          %v1369 = vadd.f32 %v1351, %v1365
          %v1370 = vpack.c.bf16 %v1366, %v1366
          %v1371 = vpack.c.bf16 %v1367, %v1367
          %v1372 = vpack.c.bf16 %v1368, %v1368
          %v1373 = vpack.c.bf16 %v1369, %v1369
          %1374 = vmatprep.subr.bf16.mxu0 0
          %1375 = vmatpush1.bf16.msra.mxu0 %v747
          %1376 = vmatprep.subr.bf16.mxu0 0
          %1377 = vmatpush1.bf16.msra.mxu0 %v748
          %1378 = vmatprep.subr.bf16.mxu0 0
          %1379 = vmatpush1.bf16.msra.mxu0 %v749
          %1380 = vmatprep.subr.bf16.mxu0 0
          %1381 = vmatpush1.bf16.msra.mxu0 %v750
          %1382 = vmatprep.subr.bf16.mxu0 0
          %1383 = vmatpush1.bf16.msra.mxu0 %v751
          %1384 = vmatprep.subr.bf16.mxu0 0
          %1385 = vmatpush1.bf16.msra.mxu0 %v752
          %1386 = vmatprep.subr.bf16.mxu0 0
          %1387 = vmatpush1.bf16.msra.mxu0 %v753
          %1388 = vmatprep.subr.bf16.mxu0 0
          %1389 = vmatpush1.bf16.msra.mxu0 %v754
          %1390 = vmatprep.subr.bf16.mxu0 0
          %1391 = vmatpush1.bf16.msra.mxu0 %v755
          %1392 = vmatprep.subr.bf16.mxu0 0
          %1393 = vmatpush1.bf16.msra.mxu0 %v756
          %1394 = vmatprep.subr.bf16.mxu0 0
          %1395 = vmatpush1.bf16.msra.mxu0 %v757
          %1396 = vmatprep.subr.bf16.mxu0 0
          %1397 = vmatpush1.bf16.msra.mxu0 %v758
          %1398 = vmatprep.subr.bf16.mxu0 0
          %1399 = vmatpush1.bf16.msra.mxu0 %v759
          %1400 = vmatprep.subr.bf16.mxu0 0
          %1401 = vmatpush1.bf16.msra.mxu0 %v760
          %1402 = vmatprep.subr.bf16.mxu0 0
          %1403 = vmatpush1.bf16.msra.mxu0 %v761
          %1404 = vmatprep.subr.bf16.mxu0 0
          %1405 = vmatpush1.bf16.msra.mxu0 %v762
          %1406 = vmatprep.mubr.bf16.mxu0 %v1371
          %1407 = vmatmul.mubr.bf16.gmra.mrb[0].mxu0 %v1370
          %v1408 = vpop.f32.mrb[0].mxu0
          %v1409 = vadd.f32 0.0, %v1408
          %v1410 = vpop.f32.mrb[0].mxu0
          %v1411 = vpop.f32.mrb[0].mxu0
          %v1412 = vpop.f32.mrb[0].mxu0
          %1413 = vdwg.mxu0
          %1414 = vmatprep.subr.bf16.mxu0 0
          %1415 = vmatpush1.bf16.msra.mxu0 %v763
          %1416 = vmatprep.subr.bf16.mxu0 0
          %1417 = vmatpush1.bf16.msra.mxu0 %v764
          %1418 = vmatprep.subr.bf16.mxu0 0
          %1419 = vmatpush1.bf16.msra.mxu0 %v765
          %1420 = vmatprep.subr.bf16.mxu0 0
          %1421 = vmatpush1.bf16.msra.mxu0 %v766
          %1422 = vmatprep.subr.bf16.mxu0 0
          %1423 = vmatpush1.bf16.msra.mxu0 %v767
          %1424 = vmatprep.subr.bf16.mxu0 0
          %1425 = vmatpush1.bf16.msra.mxu0 %v768
          %1426 = vmatprep.subr.bf16.mxu0 0
          %1427 = vmatpush1.bf16.msra.mxu0 %v769
          %1428 = vmatprep.subr.bf16.mxu0 0
          %1429 = vmatpush1.bf16.msra.mxu0 %v770
          %1430 = vmatprep.subr.bf16.mxu0 0
          %1431 = vmatpush1.bf16.msra.mxu0 %v771
          %1432 = vmatprep.subr.bf16.mxu0 0
          %1433 = vmatpush1.bf16.msra.mxu0 %v772
          %1434 = vmatprep.subr.bf16.mxu0 0
          %1435 = vmatpush1.bf16.msra.mxu0 %v773
          %1436 = vmatprep.subr.bf16.mxu0 0
          %1437 = vmatpush1.bf16.msra.mxu0 %v774
          %1438 = vmatprep.subr.bf16.mxu0 0
          %1439 = vmatpush1.bf16.msra.mxu0 %v775
          %1440 = vmatprep.subr.bf16.mxu0 0
          %1441 = vmatpush1.bf16.msra.mxu0 %v776
          %1442 = vmatprep.subr.bf16.mxu0 0
          %1443 = vmatpush1.bf16.msra.mxu0 %v777
          %1444 = vmatprep.subr.bf16.mxu0 0
          %1445 = vmatpush1.bf16.msra.mxu0 %v778
          %1446 = vmatprep.mubr.bf16.mxu0 %v1373
          %1447 = vmatmul.mubr.bf16.gmra.mrb[0].mxu0 %v1372
          %v1448 = vpop.f32.mrb[0].mxu0
          %v1449 = vadd.f32 %v1409, %v1448
          %v1450 = vpop.f32.mrb[0].mxu0
          %v1451 = vpop.f32.mrb[0].mxu0
          %v1452 = vpop.f32.mrb[0].mxu0
          %1453 = vdwg.mxu0
          %1454 = vst [vmem:[#allocation2] sm:$0xff] %v1449
        $region44: #{tpu_custom_call.1} parent=31 // pred_fallthru
          _
        %v1455 = vld [vmem:[#allocation2] sm:$0xff]
        %v1456 = vpack.c.bf16 %v1455, %v1455
        %v1457 = vld [vmem:[%s196] sm:$0xff]
        %v1458 = vld [vmem:[%s196 + $0x8] sm:$0xff]
        %v1459 = vld [vmem:[%s196 + $0x10] sm:$0xff]
        %v1460 = vld [vmem:[%s196 + $0x18] sm:$0xff]
        %v1461 = vld [vmem:[%s196 + $0x20] sm:$0xff]
        %v1462 = vld [vmem:[%s196 + $0x28] sm:$0xff]
        %v1463 = vld [vmem:[%s196 + $0x30] sm:$0xff]
        %v1464 = vld [vmem:[%s196 + $0x38] sm:$0xff]
        %v1465 = vld [vmem:[%s196 + $0x40] sm:$0xff]
        %v1466 = vld [vmem:[%s196 + $0x48] sm:$0xff]
        %v1467 = vld [vmem:[%s196 + $0x50] sm:$0xff]
        %v1468 = vld [vmem:[%s196 + $0x58] sm:$0xff]
        %v1469 = vld [vmem:[%s196 + $0x60] sm:$0xff]
        %v1470 = vld [vmem:[%s196 + $0x68] sm:$0xff]
        %v1471 = vld [vmem:[%s196 + $0x70] sm:$0xff]
        %v1472 = vld [vmem:[%s196 + $0x78] sm:$0xff]
        %v1473 = vld [vmem:[%s227] sm:$0x3]
        %v1475 = vlaneseq
        %v1476 = vshrl.u32 %v1475, 7
        %v1477 = vsub.s32 0, %v1476
        %v1478 = vrot.slane %v1473, %v1477
        %v1479 = vlaneseq
        %v1480 = vshrl.u32 %v1479, 7
        %v1481 = vsub.s32 1, %v1480
        %v1482 = vrot.slane %v1473, %v1481
        %v1501 = vunpack.c.l.b16 %v1457
        %v1502 = vunpack.c.h.b16 %v1457
        %v1503 = vunpack.c.l.b16 %v1458
        %v1504 = vunpack.c.h.b16 %v1458
        %v1505 = vunpack.c.l.b16 %v1459
        %v1506 = vunpack.c.h.b16 %v1459
        %v1507 = vunpack.c.l.b16 %v1460
        %v1508 = vunpack.c.h.b16 %v1460
        %v1509 = vunpack.c.l.b16 %v1461
        %v1510 = vunpack.c.h.b16 %v1461
        %v1511 = vunpack.c.l.b16 %v1462
        %v1512 = vunpack.c.h.b16 %v1462
        %v1513 = vunpack.c.l.b16 %v1463
        %v1514 = vunpack.c.h.b16 %v1463
        %v1515 = vunpack.c.l.b16 %v1464
        %v1516 = vunpack.c.h.b16 %v1464
        %v1517 = vunpack.c.l.b16 %v1465
        %v1518 = vunpack.c.h.b16 %v1465
        %v1519 = vunpack.c.l.b16 %v1466
        %v1520 = vunpack.c.h.b16 %v1466
        %v1521 = vunpack.c.l.b16 %v1467
        %v1522 = vunpack.c.h.b16 %v1467
        %v1523 = vunpack.c.l.b16 %v1468
        %v1524 = vunpack.c.h.b16 %v1468
        %v1525 = vunpack.c.l.b16 %v1469
        %v1526 = vunpack.c.h.b16 %v1469
        %v1527 = vunpack.c.l.b16 %v1470
        %v1528 = vunpack.c.h.b16 %v1470
        %v1529 = vunpack.c.l.b16 %v1471
        %v1530 = vunpack.c.h.b16 %v1471
        %v1531 = vunpack.c.l.b16 %v1472
        %v1532 = vunpack.c.h.b16 %v1472
        %v1533 = vpack.c.b16 %v1503, %v1501
        %v1534 = vpack.c.b16 %v1504, %v1502
        %v1535 = vpack.c.b16 %v1507, %v1505
        %v1536 = vpack.c.b16 %v1508, %v1506
        %v1537 = vpack.c.b16 %v1511, %v1509
        %v1538 = vpack.c.b16 %v1512, %v1510
        %v1539 = vpack.c.b16 %v1515, %v1513
        %v1540 = vpack.c.b16 %v1516, %v1514
        %v1541 = vpack.c.b16 %v1519, %v1517
        %v1542 = vpack.c.b16 %v1520, %v1518
        %v1543 = vpack.c.b16 %v1523, %v1521
        %v1544 = vpack.c.b16 %v1524, %v1522
        %v1545 = vpack.c.b16 %v1527, %v1525
        %v1546 = vpack.c.b16 %v1528, %v1526
        %v1547 = vpack.c.b16 %v1531, %v1529
        %v1548 = vpack.c.b16 %v1532, %v1530
        %1565 = vmatprep.subr.bf16.mxu0 %v1534
        %1566 = vmatpush1.bf16.msra.mxu0 %v1533
        %1567 = vmatprep.subr.bf16.mxu0 %v1536
        %1568 = vmatpush1.bf16.msra.mxu0 %v1535
        %1569 = vmatprep.subr.bf16.mxu0 %v1538
        %1570 = vmatpush1.bf16.msra.mxu0 %v1537
        %1571 = vmatprep.subr.bf16.mxu0 %v1540
        %1572 = vmatpush1.bf16.msra.mxu0 %v1539
        %1573 = vmatprep.subr.bf16.mxu0 %v1542
        %1574 = vmatpush1.bf16.msra.mxu0 %v1541
        %1575 = vmatprep.subr.bf16.mxu0 %v1544
        %1576 = vmatpush1.bf16.msra.mxu0 %v1543
        %1577 = vmatprep.subr.bf16.mxu0 %v1546
        %1578 = vmatpush1.bf16.msra.mxu0 %v1545
        %1579 = vmatprep.subr.bf16.mxu0 %v1548
        %1580 = vmatpush1.bf16.msra.mxu0 %v1547
        %1581 = vmatprep.subr.bf16.mxu0 0
        %1582 = vmatpush1.bf16.msra.mxu0 0
        %1583 = vmatprep.subr.bf16.mxu0 0
        %1584 = vmatpush1.bf16.msra.mxu0 0
        %1585 = vmatprep.subr.bf16.mxu0 0
        %1586 = vmatpush1.bf16.msra.mxu0 0
        %1587 = vmatprep.subr.bf16.mxu0 0
        %1588 = vmatpush1.bf16.msra.mxu0 0
        %1589 = vmatprep.subr.bf16.mxu0 0
        %1590 = vmatpush1.bf16.msra.mxu0 0
        %1591 = vmatprep.subr.bf16.mxu0 0
        %1592 = vmatpush1.bf16.msra.mxu0 0
        %1593 = vmatprep.subr.bf16.mxu0 0
        %1594 = vmatpush1.bf16.msra.mxu0 0
        %1595 = vmatprep.subr.bf16.mxu0 0
        %1596 = vmatpush1.bf16.msra.mxu0 0
        %1597 = vmatprep.mubr.bf16.mxu0 0
        %1598 = vmatmul.mubr.bf16.gmra.mrb[0].mxu0 %v1456
        %v1599 = vpop.f32.mrb[0].mxu0
        %v1600 = vadd.f32 %v1478, %v1599
        %v1601 = vpop.f32.mrb[0].mxu0
        %v1602 = vadd.f32 %v1482, %v1601
        %v1603 = vpop.f32.mrb[0].mxu0
        %v1604 = vpop.f32.mrb[0].mxu0
        %1605 = vdwg.mxu0
        %1606 = vst [vmem:[%s222] sm:$0xff] %v1600
        %1607 = vst [vmem:[%s222 + $0x8] sm:$0xff] %v1602
        %s1608 = sand.u32 %s107, 1
        %s1609 = scalar_lea.sflag [#allocation7], %s1608
        %s1610 = sand.u32 %s107, 1
        %s1611 = smul.addr %s1610, 16
        %s1612 = scalar_lea.vmem [#allocation10], %s1611
        // Predicated region
        $region45: #{tpu_custom_call.1} parent=31 // pred_check
          %p1613 = pneg %p117
        $region46: #{tpu_custom_call.1} parent=31 // pred_check_branch
          %1615 = sbr.rel (%p1613) target = $region48
        $region47: #{tpu_custom_call.1} parent=31 // pred_region
          %s1616 = smul.u32 2, %s26
          %s1618 = ssub.s32 256, 256
          %1619 = vsyncadd %s1609, %s1618
          %s1620 = smul.addr %s1616, 128
          %s1621 = scalar_lea.hbm %s4, %s1620
          %s1623 = sshll.u32 %s1612, 4
          %s1624 = int_to_ptr.vmem [resolvable:$true] %s1623
          %1626 = dma.vmem_to_hbm [thread:$0]  %s1624, 256, %s1621, %s1609
        $region48: #{tpu_custom_call.1} parent=31 // pred_fallthru
          _
      $region32: #{tpu_custom_call.1} parent=5 // pred_fallthru
        _
      %p1627 = scmp.le.s32.totalorder 2, %s21
      // Predicated region
      $region49: #{tpu_custom_call.1} parent=5 // pred_check
        %p1628 = pneg %p1627
      $region50: #{tpu_custom_call.1} parent=5 // pred_check_branch
        %1630 = sbr.rel (%p1628) target = $region52
      $region51: #{tpu_custom_call.1} parent=5 // pred_region
        %s1631 = ssub.s32 %s21, 2
        // Predicated region
        $region53: #{tpu_custom_call.1} parent=51 // pred_check
          %p1632 = pneg %p123
        $region54: #{tpu_custom_call.1} parent=51 // pred_check_branch
          %1634 = sbr.rel (%p1632) target = $region56
        $region55: #{tpu_custom_call.1} parent=51 // pred_region
          %s1635 = sand.u32 %s108, 1
          %s1636 = scalar_lea.sflag [#allocation7], %s1635
          %s1637 = sand.u32 %s108, 1
          %s1638 = smul.addr %s1637, 16
          %s1639 = scalar_lea.vmem [#allocation10], %s1638
          %1640 = dma.done %s1636, 256
        $region56: #{tpu_custom_call.1} parent=51 // pred_fallthru
          _
      $region52: #{tpu_custom_call.1} parent=5 // pred_fallthru
        _
    $region6: #{tpu_custom_call.1} parent=1 // loop_footer
      %s25 = sadd.s32 1, %s21
    $region7: #{tpu_custom_call.1} parent=1 // loop_footer_branch
      %20 = sbr.rel target = $region3
    $region8: #{tpu_custom_call.1} parent=1 // loop_exit
      _
    %1641 = vsyncpa [#allocation6], 1
    %s1642 = scalar_lea.sflag [#allocation6], 1
    %1643 = vsyncpa %s1642, 1
    %1644 = vsyncpa [#allocation9], 1
    %s1645 = scalar_lea.sflag [#allocation9], 1
    %1646 = vsyncpa %s1645, 1
    %1647 = vsyncpa [#allocation7], 1
    %s1648 = scalar_lea.sflag [#allocation7], 1
    %1649 = vsyncpa %s1648, 1

</llo_original>
